<compile_context>
chip_gen: v7x
topology: tpu7x:2x2x1
jax: 0.10.0
libtpu: 0.0.40
codegen_flags: <defaults>
</compile_context>

<pallas_src>
import jax
import jax.numpy as jnp
import numpy as np
from jax import lax
from jax.experimental import pallas as pl
from jax.experimental.pallas import tpu as pltpu


def _round_up(x, m):
    return ((x + m - 1) // m) * m


def _make_kernel(*, slen, chunk_t, bs_blk, H, nt):
    """Build the fused LayerNorm + mask + LSTM chunk + output-proj kernel."""

    def kernel(emb_ref, mask_ref, gamma_ref, beta_ref,
               w_ih_ref, w_hh_ref, b_ref, w_out_ref, b_out_ref,
               out_ref, hn_ref, cn_ref,
               hs_sc, h_sc, c_sc):
        # emb_ref  : (chunk_t*bs_blk, dim)   f32   embedded tokens (time-major)
        # mask_ref : (chunk_t*bs_blk, 1)     f32   length mask
        # gamma/beta : (1, dim)              f32   LayerNorm affine
        # w_ih_ref : (dim, 4H)  bf16 ; w_hh_ref : (H, 4H) bf16 ; b_ref : (1, 4H) f32
        # w_out_ref: (H, dim_p) bf16 (lane-padded) ; b_out_ref : (1, dim_p) f32
        # out_ref  : (chunk_t*bs_blk, dim_p) f32
        # hn_ref, cn_ref : (bs_blk, H) f32
        # hs_sc : (chunk_t*bs_blk, H) f32 ; h_sc, c_sc : (bs_blk, H) f32 (carried state)
        tc = pl.program_id(1)

        # Fresh (h, c) state at the start of every batch block's time loop.
        @pl.when(tc == 0)
        def _():
            h_sc[...] = jnp.zeros_like(h_sc)
            c_sc[...] = jnp.zeros_like(c_sc)

        # ---- Phase 1 (batched, off the serial path): LayerNorm(eps=1e-12,
        #      biased var, PyTorch semantics) + length mask + bf16 input GEMM.
        x = emb_ref[...]
        mu = jnp.mean(x, axis=-1, keepdims=True)
        var = jnp.mean((x - mu) ** 2, axis=-1, keepdims=True)
        xn = (x - mu) * lax.rsqrt(var + 1e-12)
        xn = xn * gamma_ref[...] + beta_ref[...]
        xn = xn * mask_ref[...]                               # zero padded positions
        xproj = jnp.dot(xn.astype(jnp.bfloat16), w_ih_ref[...],
                        preferred_element_type=jnp.float32) + b_ref[...]

        # ---- Phase 2 (serial recurrence): only h @ w_hh + gate math per step.
        # Unrolled over the chunk; the grid step is a live-range boundary, so
        # only chunk_t gate vregs are ever live (review: avoid full-slen unroll).
        # TODO(synk): pin w_hh in MXU weight regs via pltpu.matmul_push_rhs /
        # matmul_acc_lhs to drop the per-step RHS push from the serial path.
        w_hh = w_hh_ref[...]
        h = h_sc[...]
        c = c_sc[...]
        for t in range(chunk_t):
            r0 = t * bs_blk
            gates = xproj[r0:r0 + bs_blk, :] + jnp.dot(
                h.astype(jnp.bfloat16), w_hh, preferred_element_type=jnp.float32)
            if H >= 128:
                # Lane-aligned slices: no wasted sigmoid over the g block.
                sfi = jax.nn.sigmoid(gates[:, :2 * H])
                i_g, f_g = sfi[:, :H], sfi[:, H:]
                o_g = jax.nn.sigmoid(gates[:, 3 * H:])
            else:
                # 4H fits one vreg: a single EUP sigmoid pass is optimal.
                sig = jax.nn.sigmoid(gates)
                i_g, f_g, o_g = sig[:, :H], sig[:, H:2 * H], sig[:, 3 * H:]
            g_g = jnp.tanh(gates[:, 2 * H:3 * H])
            c_new = f_g * c + i_g * g_g
            h_new = o_g * jnp.tanh(c_new)
            if (nt - 1) * chunk_t + t >= slen:     # static: step may be slen padding
                valid = tc * chunk_t + t < slen
                h = jnp.where(valid, h_new, h)
                c = jnp.where(valid, c_new, c)
            else:
                h, c = h_new, c_new
            hs_sc[r0:r0 + bs_blk, :] = h

        # NOTE: like nn.LSTM on an *unpacked* padded tensor, the state keeps
        # updating past each sequence's length (only the input is masked).
        h_sc[...] = h
        c_sc[...] = c
        hn_ref[...] = h     # same block index across t -> written back once per batch block
        cn_ref[...] = c

        # ---- Phase 3 (fused per chunk): output projection, lane-dense store.
        out_ref[...] = (jnp.dot(hs_sc[...].astype(jnp.bfloat16), w_out_ref[...],
                                preferred_element_type=jnp.float32)
                        + b_out_ref[...])

    return kernel


def lstm_model_fwd(x, lengths, params, *, chunk_t=8,
                   vmem_budget_bytes=40 * 1024 * 1024):
    """x: int32 (slen, bs) word indices; lengths: int32 (bs).

    Returns (tensor, (h_n, c_n)) with tensor (slen, bs, dim),
    h_n/c_n (1, bs, hidden_dim) — mirrors LSTMModel.fwd (eval mode).
    On 128-MiB VMEM parts (v5e/v6e) pass a larger chunk_t / vmem_budget_bytes.
    """
    slen, bs = x.shape
    emb_table = params["embeddings"]                      # (n_words, dim)
    dim = emb_table.shape[1]
    H = params["w_hh"].shape[1]
    H4 = 4 * H
    dim_p = _round_up(dim, 128)                           # lane-dense output stores

    # Pad batch to a sublane multiple; split into blocks so the "parallel"
    # grid axis can be sharded across v7x's two TensorCores.
    bs_p = _round_up(max(bs, 8), 8)
    nb = 2 if (bs_p >= 16 and bs_p % 16 == 0) else 1
    bs_blk = bs_p // nb

    # slen chunking: bound VMEM and overlap HBM DMA with compute.
    chunk_t = max(1, min(chunk_t, slen))

    def vmem_est(ct):
        rows = ct * bs_blk
        blocks = 2 * 4 * rows * (dim + 1 + dim_p)         # double-buffered emb/mask/out
        weights = 2 * (dim * H4 + H * H4 + H * dim_p) + 4 * (H4 + dim_p + 2 * dim)
        scratch = 4 * (rows * H + 2 * bs_blk * H)
        work = 2 * 4 * rows * H4                          # xproj + gate temporaries
        return blocks + weights + scratch + work

    while chunk_t > 1 and vmem_est(chunk_t) > vmem_budget_bytes:
        chunk_t = max(1, chunk_t // 2)

    nt = -(-slen // chunk_t)
    slen_p = nt * chunk_t
    rows = chunk_t * bs_blk

    # VMEM limit derived from actual sizes + headroom, capped well below v7x's
    # 64 MiB physical VMEM (also valid on 128-MiB v5e/v6e).
    vmem_limit = int(min(48 * 1024 * 1024,
                         max(32 * 1024 * 1024, 2 * vmem_est(chunk_t))))

    pad_t = slen_p - slen
    pad_b = bs_p - bs
    x_p = jnp.pad(x, ((0, pad_t), (0, pad_b)))
    lengths_p = jnp.pad(lengths, (0, pad_b))              # padded rows: length 0

    # Transpose token ids into blocked layout BEFORE the gather so the embedded
    # slab lands directly in (nb, slen_p*bs_blk, dim) with no big HBM transpose.
    # TODO(synk): move the embedding gather in-kernel (scalar-prefetched ids +
    # DMA gather) to avoid one HBM write + read of the embedded slab.
    xb = x_p.reshape(slen_p, nb, bs_blk).transpose(1, 0, 2)
    emb = emb_table[xb].astype(jnp.float32).reshape(nb, slen_p * bs_blk, dim)

    lengths_b = lengths_p.reshape(nb, bs_blk)
    mask = (jnp.arange(slen_p)[None, :, None] < lengths_b[:, None, :])
    mask = mask.astype(jnp.float32).reshape(nb, slen_p * bs_blk, 1)

    gamma = params["ln_gamma"].reshape(1, dim).astype(jnp.float32)
    beta = params["ln_beta"].reshape(1, dim).astype(jnp.float32)
    # bf16 MXU operands; accumulation / gate math stay f32 in-kernel.
    w_ih_T = params["w_ih"].T.astype(jnp.bfloat16)        # (dim, 4H)
    w_hh_T = params["w_hh"].T.astype(jnp.bfloat16)        # (H, 4H)
    bias = (params["b_ih"] + params["b_hh"]).reshape(1, H4).astype(jnp.float32)
    w_out_T = jnp.zeros((H, dim_p), jnp.bfloat16).at[:, :dim].set(
        params["w_out"].T.astype(jnp.bfloat16))           # (H, dim_p) lane-padded
    b_out = jnp.zeros((1, dim_p), jnp.float32).at[:, :dim].set(
        params["b_out"].reshape(1, dim).astype(jnp.float32))

    const2 = lambda shape: pl.BlockSpec(shape, lambda b_, t_: (0, 0))

    out_b, hn, cn = pl.pallas_call(
        _make_kernel(slen=slen, chunk_t=chunk_t, bs_blk=bs_blk, H=H, nt=nt),
        grid=(nb, nt),
        out_shape=(jax.ShapeDtypeStruct((nb, slen_p * bs_blk, dim_p), jnp.float32),
                   jax.ShapeDtypeStruct((bs_p, H), jnp.float32),
                   jax.ShapeDtypeStruct((bs_p, H), jnp.float32)),
        in_specs=[
            pl.BlockSpec((None, rows, dim), lambda b_, t_: (b_, t_, 0)),    # emb
            pl.BlockSpec((None, rows, 1), lambda b_, t_: (b_, t_, 0)),      # mask
            const2((1, dim)), const2((1, dim)),                             # gamma, beta
            const2((dim, H4)), const2((H, H4)), const2((1, H4)),            # w_ih, w_hh, b
            const2((H, dim_p)), const2((1, dim_p)),                         # w_out, b_out
        ],
        out_specs=(
            pl.BlockSpec((None, rows, dim_p), lambda b_, t_: (b_, t_, 0)),  # out chunk
            pl.BlockSpec((bs_blk, H), lambda b_, t_: (b_, 0)),              # h_n
            pl.BlockSpec((bs_blk, H), lambda b_, t_: (b_, 0)),              # c_n
        ),
        scratch_shapes=[pltpu.VMEM((rows, H), jnp.float32),    # per-chunk hidden history
                        pltpu.VMEM((bs_blk, H), jnp.float32),  # carried h
                        pltpu.VMEM((bs_blk, H), jnp.float32)], # carried c
        compiler_params=pltpu.CompilerParams(
            dimension_semantics=("parallel", "arbitrary"),
            vmem_limit_bytes=vmem_limit),
    )(emb, mask, gamma, beta, w_ih_T, w_hh_T, bias, w_out_T, b_out)

    out = (out_b.reshape(nb, slen_p, bs_blk, dim_p)
                .transpose(1, 0, 2, 3)
                .reshape(slen_p, bs_p, dim_p)[:slen, :bs, :dim])
    return out, (hn[None, :bs], cn[None, :bs])


def reference_fwd(x, lengths, params):
    """Pure-JAX f32 reference mirroring the PyTorch module (eval mode)."""
    slen, bs = x.shape
    H = params["w_hh"].shape[1]
    emb = params["embeddings"][x]                         # (slen, bs, dim)
    mu = emb.mean(-1, keepdims=True)
    var = ((emb - mu) ** 2).mean(-1, keepdims=True)
    t = (emb - mu) / jnp.sqrt(var + 1e-12)
    t = t * params["ln_gamma"] + params["ln_beta"]
    mask = (jnp.arange(slen)[None, :] < lengths[:, None]).T.astype(jnp.float32)
    t = t * mask[..., None]

    w_ih, w_hh = params["w_ih"], params["w_hh"]
    bias = params["b_ih"] + params["b_hh"]

    def step(carry, xt):
        h, c = carry
        gates = xt @ w_ih.T + h @ w_hh.T + bias
        i = jax.nn.sigmoid(gates[:, 0 * H:1 * H])
        f = jax.nn.sigmoid(gates[:, 1 * H:2 * H])
        g = jnp.tanh(gates[:, 2 * H:3 * H])
        o = jax.nn.sigmoid(gates[:, 3 * H:4 * H])
        c = f * c + i * g
        h = o * jnp.tanh(c)
        return (h, c), h

    h0 = jnp.zeros((bs, H), jnp.float32)
    c0 = jnp.zeros((bs, H), jnp.float32)
    (hn, cn), hs = jax.lax.scan(step, (h0, c0), t)
    out = hs @ params["w_out"].T + params["b_out"]
    return out, (hn[None], cn[None])


def make_params(key, n_words, dim, hidden, pad_index):
    ks = jax.random.split(key, 8)
    s = 0.1
    emb = s * jax.random.normal(ks[0], (n_words, dim), jnp.float32)
    emb = emb.at[pad_index].set(0.0)                      # padding_idx row = 0
    return {
        "embeddings": emb,
        "ln_gamma": jnp.ones((dim,), jnp.float32),
        "ln_beta": jnp.zeros((dim,), jnp.float32),
        "w_ih": s * jax.random.normal(ks[1], (4 * hidden, dim), jnp.float32),
        "w_hh": s * jax.random.normal(ks[2], (4 * hidden, hidden), jnp.float32),
        "b_ih": s * jax.random.normal(ks[3], (4 * hidden,), jnp.float32),
        "b_hh": s * jax.random.normal(ks[4], (4 * hidden,), jnp.float32),
        "w_out": s * jax.random.normal(ks[5], (dim, hidden), jnp.float32),
        "b_out": s * jax.random.normal(ks[6], (dim,), jnp.float32),
    }


if __name__ == "__main__":
    n_words, dim, hidden = 100, 32, 32
    slen, bs = 8, 2
    pad_index = 2

    key = jax.random.PRNGKey(0)
    kp, kx = jax.random.split(key)
    params = make_params(kp, n_words, dim, hidden, pad_index)

    x = jax.random.randint(kx, (slen, bs), 3, n_words, dtype=jnp.int32)
    lengths = jnp.array([slen, 5], dtype=jnp.int32)

    out, (hn, cn) = lstm_model_fwd(x, lengths, params)
    jax.block_until_ready(out)
    jax.block_until_ready(hn)
    jax.block_until_ready(cn)

    ref_out, (ref_hn, ref_cn) = reference_fwd(x, lengths, params)
    # Tolerance widened vs the pure-f32 version: the kernel uses bf16 MXU
    # operands with f32 accumulation (per perf review).
    np.testing.assert_allclose(np.asarray(out), np.asarray(ref_out),
                               rtol=2e-2, atol=2e-2)
    np.testing.assert_allclose(np.asarray(hn), np.asarray(ref_hn),
                               rtol=2e-2, atol=2e-2)
    np.testing.assert_allclose(np.asarray(cn), np.asarray(ref_cn),
                               rtol=2e-2, atol=2e-2)
    assert out.shape == (slen, bs, dim)
    assert hn.shape == (1, bs, hidden) and cn.shape == (1, bs, hidden)

    # TODO(synk): bidirectional / multi-layer LSTM, GRU variant, and the
    # predict/generate (cross-entropy, top-k, beam) paths are not kernelized.
    print("KERNEL_OK")
</pallas_src>

<mosaic_0001>
module attributes {stable_mosaic.version = 11 : i64} {
  func.func @kernel(%arg0: i32, %arg1: i32, %arg2: memref<1x64x32xf32, #tpu.memory_space<vmem>>, %arg3: memref<1x64x1xf32, #tpu.memory_space<vmem>>, %arg4: memref<1x32xf32, #tpu.memory_space<vmem>>, %arg5: memref<1x32xf32, #tpu.memory_space<vmem>>, %arg6: memref<32x128xbf16, #tpu.memory_space<vmem>>, %arg7: memref<32x128xbf16, #tpu.memory_space<vmem>>, %arg8: memref<1x128xf32, #tpu.memory_space<vmem>>, %arg9: memref<32x128xbf16, #tpu.memory_space<vmem>>, %arg10: memref<1x128xf32, #tpu.memory_space<vmem>>, %arg11: memref<1x64x128xf32, #tpu.memory_space<vmem>>, %arg12: memref<8x32xf32, #tpu.memory_space<vmem>>, %arg13: memref<8x32xf32, #tpu.memory_space<vmem>>, %arg14: memref<64x32xf32, #tpu.memory_space<vmem>>, %arg15: memref<8x32xf32, #tpu.memory_space<vmem>>, %arg16: memref<8x32xf32, #tpu.memory_space<vmem>>) attributes {dimension_semantics = [#tpu.dimension_semantics<parallel>, #tpu.dimension_semantics<arbitrary>], iteration_bounds = array<i64: 1, 1>, scalar_prefetch = 0 : i64, scratch_operands = 3 : i64, tpu.core_type = #tpu.core_type<tc>, window_params = [{transform_indices = @transform_0, window_bounds = array<i64: 1, 64, 32>}, {transform_indices = @transform_1, window_bounds = array<i64: 1, 64, 1>}, {pipeline_mode = #tpu.pipeline_mode<synchronous>, transform_indices = @transform_2, window_bounds = array<i64: 1, 32>}, {pipeline_mode = #tpu.pipeline_mode<synchronous>, transform_indices = @transform_3, window_bounds = array<i64: 1, 32>}, {pipeline_mode = #tpu.pipeline_mode<synchronous>, transform_indices = @transform_4, window_bounds = array<i64: 32, 128>}, {pipeline_mode = #tpu.pipeline_mode<synchronous>, transform_indices = @transform_5, window_bounds = array<i64: 32, 128>}, {pipeline_mode = #tpu.pipeline_mode<synchronous>, transform_indices = @transform_6, window_bounds = array<i64: 1, 128>}, {pipeline_mode = #tpu.pipeline_mode<synchronous>, transform_indices = @transform_7, window_bounds = array<i64: 32, 128>}, {pipeline_mode = #tpu.pipeline_mode<synchronous>, transform_indices = @transform_8, window_bounds = array<i64: 1, 128>}, {transform_indices = @transform_9, window_bounds = array<i64: 1, 64, 128>}, {transform_indices = @transform_10, window_bounds = array<i64: 8, 32>}, {transform_indices = @transform_11, window_bounds = array<i64: 8, 32>}]} {
    %c0_i32 = arith.constant 0 : i32
    %0 = arith.cmpi eq, %arg1, %c0_i32 : i32
    %1 = arith.extui %0 : i1 to i32
    %c0_i32_0 = arith.constant 0 : i32
    %2 = arith.cmpi ne, %1, %c0_i32_0 : i32
    scf.if %2 {
      %cst_68 = arith.constant 0.000000e+00 : f32
      %216 = vector.broadcast %cst_68 : f32 to vector<8x32xf32>
      %c0_69 = arith.constant 0 : index
      %c0_70 = arith.constant 0 : index
      %217 = vector.load %arg15[%c0_69, %c0_70] : memref<8x32xf32, #tpu.memory_space<vmem>>, vector<8x32xf32>
      tpu.vector_store %arg15[%c0_69, %c0_70], %216 {strides = array<i32>} : memref<8x32xf32, #tpu.memory_space<vmem>>, vector<8x32xf32>,
      %cst_71 = arith.constant 0.000000e+00 : f32
      %218 = vector.broadcast %cst_71 : f32 to vector<8x32xf32>
      %c0_72 = arith.constant 0 : index
      %c0_73 = arith.constant 0 : index
      %219 = vector.load %arg16[%c0_72, %c0_73] : memref<8x32xf32, #tpu.memory_space<vmem>>, vector<8x32xf32>
      tpu.vector_store %arg16[%c0_72, %c0_73], %218 {strides = array<i32>} : memref<8x32xf32, #tpu.memory_space<vmem>>, vector<8x32xf32>,
    } else {
    }
    %c0 = arith.constant 0 : index
    %c0_1 = arith.constant 0 : index
    %c0_2 = arith.constant 0 : index
    %3 = vector.load %arg2[%c0, %c0_1, %c0_2] : memref<1x64x32xf32, #tpu.memory_space<vmem>>, vector<1x64x32xf32>
    %4 = vector.shape_cast %3 : vector<1x64x32xf32> to vector<64x32xf32>
    %cst = arith.constant dense<0.000000e+00> : vector<64xf32>
    %5 = vector.multi_reduction <add>, %4, %cst [1] : vector<64x32xf32> to vector<64xf32>
    %6 = vector.shape_cast %5 : vector<64xf32> to vector<64x1xf32>
    %cst_3 = arith.constant 3.200000e+01 : f32
    %7 = vector.broadcast %cst_3 : f32 to vector<64x1xf32>
    %8 = arith.divf %6, %7 : vector<64x1xf32>
    %9 = vector.broadcast %8 : vector<64x1xf32> to vector<64x32xf32>
    %10 = arith.subf %4, %9 : vector<64x32xf32>
    %11 = arith.mulf %10, %10 : vector<64x32xf32>
    %cst_4 = arith.constant dense<0.000000e+00> : vector<64xf32>
    %12 = vector.multi_reduction <add>, %11, %cst_4 [1] : vector<64x32xf32> to vector<64xf32>
    %13 = vector.shape_cast %12 : vector<64xf32> to vector<64x1xf32>
    %cst_5 = arith.constant 3.200000e+01 : f32
    %14 = vector.broadcast %cst_5 : f32 to vector<64x1xf32>
    %15 = arith.divf %13, %14 : vector<64x1xf32>
    %16 = vector.broadcast %8 : vector<64x1xf32> to vector<64x32xf32>
    %17 = arith.subf %4, %16 : vector<64x32xf32>
    %cst_6 = arith.constant 9.99999996E-13 : f32
    %18 = vector.broadcast %cst_6 : f32 to vector<64x1xf32>
    %19 = arith.addf %15, %18 : vector<64x1xf32>
    %20 = math.rsqrt %19 : vector<64x1xf32>
    %21 = vector.broadcast %20 : vector<64x1xf32> to vector<64x32xf32>
    %22 = arith.mulf %17, %21 : vector<64x32xf32>
    %c0_7 = arith.constant 0 : index
    %c0_8 = arith.constant 0 : index
    %23 = vector.load %arg4[%c0_7, %c0_8] : memref<1x32xf32, #tpu.memory_space<vmem>>, vector<1x32xf32>
    %24 = vector.broadcast %23 : vector<1x32xf32> to vector<64x32xf32>
    %25 = arith.mulf %22, %24 : vector<64x32xf32>
    %c0_9 = arith.constant 0 : index
    %c0_10 = arith.constant 0 : index
    %26 = vector.load %arg5[%c0_9, %c0_10] : memref<1x32xf32, #tpu.memory_space<vmem>>, vector<1x32xf32>
    %27 = vector.broadcast %26 : vector<1x32xf32> to vector<64x32xf32>
    %28 = arith.addf %25, %27 : vector<64x32xf32>
    %c0_11 = arith.constant 0 : index
    %c0_12 = arith.constant 0 : index
    %c0_13 = arith.constant 0 : index
    %29 = vector.load %arg3[%c0_11, %c0_12, %c0_13] : memref<1x64x1xf32, #tpu.memory_space<vmem>>, vector<1x64x1xf32>
    %30 = vector.shape_cast %29 : vector<1x64x1xf32> to vector<64x1xf32>
    %31 = vector.broadcast %30 : vector<64x1xf32> to vector<64x32xf32>
    %32 = arith.mulf %28, %31 : vector<64x32xf32>
    %33 = arith.truncf %32 : vector<64x32xf32> to vector<64x32xbf16>
    %c0_14 = arith.constant 0 : index
    %c0_15 = arith.constant 0 : index
    %34 = vector.load %arg6[%c0_14, %c0_15] : memref<32x128xbf16, #tpu.memory_space<vmem>>, vector<32x128xbf16>
    %cst_16 = arith.constant dense<0.000000e+00> : vector<64x128xf32>
    %35 = tpu.matmul %33, %34, %cst_16 {dimension_numbers = #tpu.dot_dimension_numbers<[1], [0], [0], [1], [0, 0, 1, 1], [], []>} : vector<64x32xbf16>, vector<32x128xbf16>, vector<64x128xf32> -> vector<64x128xf32>
    %c0_17 = arith.constant 0 : index
    %c0_18 = arith.constant 0 : index
    %36 = vector.load %arg8[%c0_17, %c0_18] : memref<1x128xf32, #tpu.memory_space<vmem>>, vector<1x128xf32>
    %37 = vector.broadcast %36 : vector<1x128xf32> to vector<64x128xf32>
    %38 = arith.addf %35, %37 : vector<64x128xf32>
    %c0_19 = arith.constant 0 : index
    %c0_20 = arith.constant 0 : index
    %39 = vector.load %arg7[%c0_19, %c0_20] : memref<32x128xbf16, #tpu.memory_space<vmem>>, vector<32x128xbf16>
    %c0_21 = arith.constant 0 : index
    %c0_22 = arith.constant 0 : index
    %40 = vector.load %arg15[%c0_21, %c0_22] : memref<8x32xf32, #tpu.memory_space<vmem>>, vector<8x32xf32>
    %c0_23 = arith.constant 0 : index
    %c0_24 = arith.constant 0 : index
    %41 = vector.load %arg16[%c0_23, %c0_24] : memref<8x32xf32, #tpu.memory_space<vmem>>, vector<8x32xf32>
    %42 = vector.extract_strided_slice %38 {offsets = [0, 0], sizes = [8, 128], strides = [1, 1]} : vector<64x128xf32> to vector<8x128xf32>
    %43 = arith.truncf %40 : vector<8x32xf32> to vector<8x32xbf16>
    %cst_25 = arith.constant dense<0.000000e+00> : vector<8x128xf32>
    %44 = tpu.matmul %43, %39, %cst_25 {dimension_numbers = #tpu.dot_dimension_numbers<[1], [0], [0], [1], [0, 0, 1, 1], [], []>} : vector<8x32xbf16>, vector<32x128xbf16>, vector<8x128xf32> -> vector<8x128xf32>
    %45 = arith.addf %42, %44 : vector<8x128xf32>
    %46 = arith.negf %45 : vector<8x128xf32>
    %47 = math.exp %46 : vector<8x128xf32>
    %cst_26 = arith.constant 1.000000e+00 : f32
    %48 = vector.broadcast %cst_26 : f32 to vector<8x128xf32>
    %49 = arith.addf %48, %47 : vector<8x128xf32>
    %50 = arith.divf %48, %49 : vector<8x128xf32>
    %51 = vector.extract_strided_slice %50 {offsets = [0, 0], sizes = [8, 32], strides = [1, 1]} : vector<8x128xf32> to vector<8x32xf32>
    %52 = vector.extract_strided_slice %50 {offsets = [0, 32], sizes = [8, 32], strides = [1, 1]} : vector<8x128xf32> to vector<8x32xf32>
    %53 = vector.extract_strided_slice %50 {offsets = [0, 96], sizes = [8, 32], strides = [1, 1]} : vector<8x128xf32> to vector<8x32xf32>
    %54 = vector.extract_strided_slice %45 {offsets = [0, 64], sizes = [8, 32], strides = [1, 1]} : vector<8x128xf32> to vector<8x32xf32>
    %55 = math.tanh %54 : vector<8x32xf32>
    %56 = arith.mulf %52, %41 : vector<8x32xf32>
    %57 = arith.mulf %51, %55 : vector<8x32xf32>
    %58 = arith.addf %56, %57 : vector<8x32xf32>
    %59 = math.tanh %58 : vector<8x32xf32>
    %60 = arith.mulf %53, %59 : vector<8x32xf32>
    %c0_27 = arith.constant 0 : index
    %c0_28 = arith.constant 0 : index
    %61 = vector.load %arg14[%c0_27, %c0_28] : memref<64x32xf32, #tpu.memory_space<vmem>>, vector<8x32xf32>
    tpu.vector_store %arg14[%c0_27, %c0_28], %60 {strides = array<i32>} : memref<64x32xf32, #tpu.memory_space<vmem>>, vector<8x32xf32>,
    %62 = vector.extract_strided_slice %38 {offsets = [8, 0], sizes = [8, 128], strides = [1, 1]} : vector<64x128xf32> to vector<8x128xf32>
    %63 = arith.truncf %60 : vector<8x32xf32> to vector<8x32xbf16>
    %cst_29 = arith.constant dense<0.000000e+00> : vector<8x128xf32>
    %64 = tpu.matmul %63, %39, %cst_29 {dimension_numbers = #tpu.dot_dimension_numbers<[1], [0], [0], [1], [0, 0, 1, 1], [], []>} : vector<8x32xbf16>, vector<32x128xbf16>, vector<8x128xf32> -> vector<8x128xf32>
    %65 = arith.addf %62, %64 : vector<8x128xf32>
    %66 = arith.negf %65 : vector<8x128xf32>
    %67 = math.exp %66 : vector<8x128xf32>
    %cst_30 = arith.constant 1.000000e+00 : f32
    %68 = vector.broadcast %cst_30 : f32 to vector<8x128xf32>
    %69 = arith.addf %68, %67 : vector<8x128xf32>
    %70 = arith.divf %68, %69 : vector<8x128xf32>
    %71 = vector.extract_strided_slice %70 {offsets = [0, 0], sizes = [8, 32], strides = [1, 1]} : vector<8x128xf32> to vector<8x32xf32>
    %72 = vector.extract_strided_slice %70 {offsets = [0, 32], sizes = [8, 32], strides = [1, 1]} : vector<8x128xf32> to vector<8x32xf32>
    %73 = vector.extract_strided_slice %70 {offsets = [0, 96], sizes = [8, 32], strides = [1, 1]} : vector<8x128xf32> to vector<8x32xf32>
    %74 = vector.extract_strided_slice %65 {offsets = [0, 64], sizes = [8, 32], strides = [1, 1]} : vector<8x128xf32> to vector<8x32xf32>
    %75 = math.tanh %74 : vector<8x32xf32>
    %76 = arith.mulf %72, %58 : vector<8x32xf32>
    %77 = arith.mulf %71, %75 : vector<8x32xf32>
    %78 = arith.addf %76, %77 : vector<8x32xf32>
    %79 = math.tanh %78 : vector<8x32xf32>
    %80 = arith.mulf %73, %79 : vector<8x32xf32>
    %c8 = arith.constant 8 : index
    %c0_31 = arith.constant 0 : index
    %81 = vector.load %arg14[%c8, %c0_31] : memref<64x32xf32, #tpu.memory_space<vmem>>, vector<8x32xf32>
    tpu.vector_store %arg14[%c8, %c0_31], %80 {strides = array<i32>} : memref<64x32xf32, #tpu.memory_space<vmem>>, vector<8x32xf32>,
    %82 = vector.extract_strided_slice %38 {offsets = [16, 0], sizes = [8, 128], strides = [1, 1]} : vector<64x128xf32> to vector<8x128xf32>
    %83 = arith.truncf %80 : vector<8x32xf32> to vector<8x32xbf16>
    %cst_32 = arith.constant dense<0.000000e+00> : vector<8x128xf32>
    %84 = tpu.matmul %83, %39, %cst_32 {dimension_numbers = #tpu.dot_dimension_numbers<[1], [0], [0], [1], [0, 0, 1, 1], [], []>} : vector<8x32xbf16>, vector<32x128xbf16>, vector<8x128xf32> -> vector<8x128xf32>
    %85 = arith.addf %82, %84 : vector<8x128xf32>
    %86 = arith.negf %85 : vector<8x128xf32>
    %87 = math.exp %86 : vector<8x128xf32>
    %cst_33 = arith.constant 1.000000e+00 : f32
    %88 = vector.broadcast %cst_33 : f32 to vector<8x128xf32>
    %89 = arith.addf %88, %87 : vector<8x128xf32>
    %90 = arith.divf %88, %89 : vector<8x128xf32>
    %91 = vector.extract_strided_slice %90 {offsets = [0, 0], sizes = [8, 32], strides = [1, 1]} : vector<8x128xf32> to vector<8x32xf32>
    %92 = vector.extract_strided_slice %90 {offsets = [0, 32], sizes = [8, 32], strides = [1, 1]} : vector<8x128xf32> to vector<8x32xf32>
    %93 = vector.extract_strided_slice %90 {offsets = [0, 96], sizes = [8, 32], strides = [1, 1]} : vector<8x128xf32> to vector<8x32xf32>
    %94 = vector.extract_strided_slice %85 {offsets = [0, 64], sizes = [8, 32], strides = [1, 1]} : vector<8x128xf32> to vector<8x32xf32>
    %95 = math.tanh %94 : vector<8x32xf32>
    %96 = arith.mulf %92, %78 : vector<8x32xf32>
    %97 = arith.mulf %91, %95 : vector<8x32xf32>
    %98 = arith.addf %96, %97 : vector<8x32xf32>
    %99 = math.tanh %98 : vector<8x32xf32>
    %100 = arith.mulf %93, %99 : vector<8x32xf32>
    %c16 = arith.constant 16 : index
    %c0_34 = arith.constant 0 : index
    %101 = vector.load %arg14[%c16, %c0_34] : memref<64x32xf32, #tpu.memory_space<vmem>>, vector<8x32xf32>
    tpu.vector_store %arg14[%c16, %c0_34], %100 {strides = array<i32>} : memref<64x32xf32, #tpu.memory_space<vmem>>, vector<8x32xf32>,
    %102 = vector.extract_strided_slice %38 {offsets = [24, 0], sizes = [8, 128], strides = [1, 1]} : vector<64x128xf32> to vector<8x128xf32>
    %103 = arith.truncf %100 : vector<8x32xf32> to vector<8x32xbf16>
    %cst_35 = arith.constant dense<0.000000e+00> : vector<8x128xf32>
    %104 = tpu.matmul %103, %39, %cst_35 {dimension_numbers = #tpu.dot_dimension_numbers<[1], [0], [0], [1], [0, 0, 1, 1], [], []>} : vector<8x32xbf16>, vector<32x128xbf16>, vector<8x128xf32> -> vector<8x128xf32>
    %105 = arith.addf %102, %104 : vector<8x128xf32>
    %106 = arith.negf %105 : vector<8x128xf32>
    %107 = math.exp %106 : vector<8x128xf32>
    %cst_36 = arith.constant 1.000000e+00 : f32
    %108 = vector.broadcast %cst_36 : f32 to vector<8x128xf32>
    %109 = arith.addf %108, %107 : vector<8x128xf32>
    %110 = arith.divf %108, %109 : vector<8x128xf32>
    %111 = vector.extract_strided_slice %110 {offsets = [0, 0], sizes = [8, 32], strides = [1, 1]} : vector<8x128xf32> to vector<8x32xf32>
    %112 = vector.extract_strided_slice %110 {offsets = [0, 32], sizes = [8, 32], strides = [1, 1]} : vector<8x128xf32> to vector<8x32xf32>
    %113 = vector.extract_strided_slice %110 {offsets = [0, 96], sizes = [8, 32], strides = [1, 1]} : vector<8x128xf32> to vector<8x32xf32>
    %114 = vector.extract_strided_slice %105 {offsets = [0, 64], sizes = [8, 32], strides = [1, 1]} : vector<8x128xf32> to vector<8x32xf32>
    %115 = math.tanh %114 : vector<8x32xf32>
    %116 = arith.mulf %112, %98 : vector<8x32xf32>
    %117 = arith.mulf %111, %115 : vector<8x32xf32>
    %118 = arith.addf %116, %117 : vector<8x32xf32>
    %119 = math.tanh %118 : vector<8x32xf32>
    %120 = arith.mulf %113, %119 : vector<8x32xf32>
    %c24 = arith.constant 24 : index
    %c0_37 = arith.constant 0 : index
    %121 = vector.load %arg14[%c24, %c0_37] : memref<64x32xf32, #tpu.memory_space<vmem>>, vector<8x32xf32>
    tpu.vector_store %arg14[%c24, %c0_37], %120 {strides = array<i32>} : memref<64x32xf32, #tpu.memory_space<vmem>>, vector<8x32xf32>,
    %122 = vector.extract_strided_slice %38 {offsets = [32, 0], sizes = [8, 128], strides = [1, 1]} : vector<64x128xf32> to vector<8x128xf32>
    %123 = arith.truncf %120 : vector<8x32xf32> to vector<8x32xbf16>
    %cst_38 = arith.constant dense<0.000000e+00> : vector<8x128xf32>
    %124 = tpu.matmul %123, %39, %cst_38 {dimension_numbers = #tpu.dot_dimension_numbers<[1], [0], [0], [1], [0, 0, 1, 1], [], []>} : vector<8x32xbf16>, vector<32x128xbf16>, vector<8x128xf32> -> vector<8x128xf32>
    %125 = arith.addf %122, %124 : vector<8x128xf32>
    %126 = arith.negf %125 : vector<8x128xf32>
    %127 = math.exp %126 : vector<8x128xf32>
    %cst_39 = arith.constant 1.000000e+00 : f32
    %128 = vector.broadcast %cst_39 : f32 to vector<8x128xf32>
    %129 = arith.addf %128, %127 : vector<8x128xf32>
    %130 = arith.divf %128, %129 : vector<8x128xf32>
    %131 = vector.extract_strided_slice %130 {offsets = [0, 0], sizes = [8, 32], strides = [1, 1]} : vector<8x128xf32> to vector<8x32xf32>
    %132 = vector.extract_strided_slice %130 {offsets = [0, 32], sizes = [8, 32], strides = [1, 1]} : vector<8x128xf32> to vector<8x32xf32>
    %133 = vector.extract_strided_slice %130 {offsets = [0, 96], sizes = [8, 32], strides = [1, 1]} : vector<8x128xf32> to vector<8x32xf32>
    %134 = vector.extract_strided_slice %125 {offsets = [0, 64], sizes = [8, 32], strides = [1, 1]} : vector<8x128xf32> to vector<8x32xf32>
    %135 = math.tanh %134 : vector<8x32xf32>
    %136 = arith.mulf %132, %118 : vector<8x32xf32>
    %137 = arith.mulf %131, %135 : vector<8x32xf32>
    %138 = arith.addf %136, %137 : vector<8x32xf32>
    %139 = math.tanh %138 : vector<8x32xf32>
    %140 = arith.mulf %133, %139 : vector<8x32xf32>
    %c32 = arith.constant 32 : index
    %c0_40 = arith.constant 0 : index
    %141 = vector.load %arg14[%c32, %c0_40] : memref<64x32xf32, #tpu.memory_space<vmem>>, vector<8x32xf32>
    tpu.vector_store %arg14[%c32, %c0_40], %140 {strides = array<i32>} : memref<64x32xf32, #tpu.memory_space<vmem>>, vector<8x32xf32>,
    %142 = vector.extract_strided_slice %38 {offsets = [40, 0], sizes = [8, 128], strides = [1, 1]} : vector<64x128xf32> to vector<8x128xf32>
    %143 = arith.truncf %140 : vector<8x32xf32> to vector<8x32xbf16>
    %cst_41 = arith.constant dense<0.000000e+00> : vector<8x128xf32>
    %144 = tpu.matmul %143, %39, %cst_41 {dimension_numbers = #tpu.dot_dimension_numbers<[1], [0], [0], [1], [0, 0, 1, 1], [], []>} : vector<8x32xbf16>, vector<32x128xbf16>, vector<8x128xf32> -> vector<8x128xf32>
    %145 = arith.addf %142, %144 : vector<8x128xf32>
    %146 = arith.negf %145 : vector<8x128xf32>
    %147 = math.exp %146 : vector<8x128xf32>
    %cst_42 = arith.constant 1.000000e+00 : f32
    %148 = vector.broadcast %cst_42 : f32 to vector<8x128xf32>
    %149 = arith.addf %148, %147 : vector<8x128xf32>
    %150 = arith.divf %148, %149 : vector<8x128xf32>
    %151 = vector.extract_strided_slice %150 {offsets = [0, 0], sizes = [8, 32], strides = [1, 1]} : vector<8x128xf32> to vector<8x32xf32>
    %152 = vector.extract_strided_slice %150 {offsets = [0, 32], sizes = [8, 32], strides = [1, 1]} : vector<8x128xf32> to vector<8x32xf32>
    %153 = vector.extract_strided_slice %150 {offsets = [0, 96], sizes = [8, 32], strides = [1, 1]} : vector<8x128xf32> to vector<8x32xf32>
    %154 = vector.extract_strided_slice %145 {offsets = [0, 64], sizes = [8, 32], strides = [1, 1]} : vector<8x128xf32> to vector<8x32xf32>
    %155 = math.tanh %154 : vector<8x32xf32>
    %156 = arith.mulf %152, %138 : vector<8x32xf32>
    %157 = arith.mulf %151, %155 : vector<8x32xf32>
    %158 = arith.addf %156, %157 : vector<8x32xf32>
    %159 = math.tanh %158 : vector<8x32xf32>
    %160 = arith.mulf %153, %159 : vector<8x32xf32>
    %c40 = arith.constant 40 : index
    %c0_43 = arith.constant 0 : index
    %161 = vector.load %arg14[%c40, %c0_43] : memref<64x32xf32, #tpu.memory_space<vmem>>, vector<8x32xf32>
    tpu.vector_store %arg14[%c40, %c0_43], %160 {strides = array<i32>} : memref<64x32xf32, #tpu.memory_space<vmem>>, vector<8x32xf32>,
    %162 = vector.extract_strided_slice %38 {offsets = [48, 0], sizes = [8, 128], strides = [1, 1]} : vector<64x128xf32> to vector<8x128xf32>
    %163 = arith.truncf %160 : vector<8x32xf32> to vector<8x32xbf16>
    %cst_44 = arith.constant dense<0.000000e+00> : vector<8x128xf32>
    %164 = tpu.matmul %163, %39, %cst_44 {dimension_numbers = #tpu.dot_dimension_numbers<[1], [0], [0], [1], [0, 0, 1, 1], [], []>} : vector<8x32xbf16>, vector<32x128xbf16>, vector<8x128xf32> -> vector<8x128xf32>
    %165 = arith.addf %162, %164 : vector<8x128xf32>
    %166 = arith.negf %165 : vector<8x128xf32>
    %167 = math.exp %166 : vector<8x128xf32>
    %cst_45 = arith.constant 1.000000e+00 : f32
    %168 = vector.broadcast %cst_45 : f32 to vector<8x128xf32>
    %169 = arith.addf %168, %167 : vector<8x128xf32>
    %170 = arith.divf %168, %169 : vector<8x128xf32>
    %171 = vector.extract_strided_slice %170 {offsets = [0, 0], sizes = [8, 32], strides = [1, 1]} : vector<8x128xf32> to vector<8x32xf32>
    %172 = vector.extract_strided_slice %170 {offsets = [0, 32], sizes = [8, 32], strides = [1, 1]} : vector<8x128xf32> to vector<8x32xf32>
    %173 = vector.extract_strided_slice %170 {offsets = [0, 96], sizes = [8, 32], strides = [1, 1]} : vector<8x128xf32> to vector<8x32xf32>
    %174 = vector.extract_strided_slice %165 {offsets = [0, 64], sizes = [8, 32], strides = [1, 1]} : vector<8x128xf32> to vector<8x32xf32>
    %175 = math.tanh %174 : vector<8x32xf32>
    %176 = arith.mulf %172, %158 : vector<8x32xf32>
    %177 = arith.mulf %171, %175 : vector<8x32xf32>
    %178 = arith.addf %176, %177 : vector<8x32xf32>
    %179 = math.tanh %178 : vector<8x32xf32>
    %180 = arith.mulf %173, %179 : vector<8x32xf32>
    %c48 = arith.constant 48 : index
    %c0_46 = arith.constant 0 : index
    %181 = vector.load %arg14[%c48, %c0_46] : memref<64x32xf32, #tpu.memory_space<vmem>>, vector<8x32xf32>
    tpu.vector_store %arg14[%c48, %c0_46], %180 {strides = array<i32>} : memref<64x32xf32, #tpu.memory_space<vmem>>, vector<8x32xf32>,
    %182 = vector.extract_strided_slice %38 {offsets = [56, 0], sizes = [8, 128], strides = [1, 1]} : vector<64x128xf32> to vector<8x128xf32>
    %183 = arith.truncf %180 : vector<8x32xf32> to vector<8x32xbf16>
    %cst_47 = arith.constant dense<0.000000e+00> : vector<8x128xf32>
    %184 = tpu.matmul %183, %39, %cst_47 {dimension_numbers = #tpu.dot_dimension_numbers<[1], [0], [0], [1], [0, 0, 1, 1], [], []>} : vector<8x32xbf16>, vector<32x128xbf16>, vector<8x128xf32> -> vector<8x128xf32>
    %185 = arith.addf %182, %184 : vector<8x128xf32>
    %186 = arith.negf %185 : vector<8x128xf32>
    %187 = math.exp %186 : vector<8x128xf32>
    %cst_48 = arith.constant 1.000000e+00 : f32
    %188 = vector.broadcast %cst_48 : f32 to vector<8x128xf32>
    %189 = arith.addf %188, %187 : vector<8x128xf32>
    %190 = arith.divf %188, %189 : vector<8x128xf32>
    %191 = vector.extract_strided_slice %190 {offsets = [0, 0], sizes = [8, 32], strides = [1, 1]} : vector<8x128xf32> to vector<8x32xf32>
    %192 = vector.extract_strided_slice %190 {offsets = [0, 32], sizes = [8, 32], strides = [1, 1]} : vector<8x128xf32> to vector<8x32xf32>
    %193 = vector.extract_strided_slice %190 {offsets = [0, 96], sizes = [8, 32], strides = [1, 1]} : vector<8x128xf32> to vector<8x32xf32>
    %194 = vector.extract_strided_slice %185 {offsets = [0, 64], sizes = [8, 32], strides = [1, 1]} : vector<8x128xf32> to vector<8x32xf32>
    %195 = math.tanh %194 : vector<8x32xf32>
    %196 = arith.mulf %192, %178 : vector<8x32xf32>
    %197 = arith.mulf %191, %195 : vector<8x32xf32>
    %198 = arith.addf %196, %197 : vector<8x32xf32>
    %199 = math.tanh %198 : vector<8x32xf32>
    %200 = arith.mulf %193, %199 : vector<8x32xf32>
    %c56 = arith.constant 56 : index
    %c0_49 = arith.constant 0 : index
    %201 = vector.load %arg14[%c56, %c0_49] : memref<64x32xf32, #tpu.memory_space<vmem>>, vector<8x32xf32>
    tpu.vector_store %arg14[%c56, %c0_49], %200 {strides = array<i32>} : memref<64x32xf32, #tpu.memory_space<vmem>>, vector<8x32xf32>,
    %c0_50 = arith.constant 0 : index
    %c0_51 = arith.constant 0 : index
    %202 = vector.load %arg15[%c0_50, %c0_51] : memref<8x32xf32, #tpu.memory_space<vmem>>, vector<8x32xf32>
    tpu.vector_store %arg15[%c0_50, %c0_51], %200 {strides = array<i32>} : memref<8x32xf32, #tpu.memory_space<vmem>>, vector<8x32xf32>,
    %c0_52 = arith.constant 0 : index
    %c0_53 = arith.constant 0 : index
    %203 = vector.load %arg16[%c0_52, %c0_53] : memref<8x32xf32, #tpu.memory_space<vmem>>, vector<8x32xf32>
    tpu.vector_store %arg16[%c0_52, %c0_53], %198 {strides = array<i32>} : memref<8x32xf32, #tpu.memory_space<vmem>>, vector<8x32xf32>,
    %c0_54 = arith.constant 0 : index
    %c0_55 = arith.constant 0 : index
    %204 = vector.load %arg12[%c0_54, %c0_55] : memref<8x32xf32, #tpu.memory_space<vmem>>, vector<8x32xf32>
    tpu.vector_store %arg12[%c0_54, %c0_55], %200 {strides = array<i32>} : memref<8x32xf32, #tpu.memory_space<vmem>>, vector<8x32xf32>,
    %c0_56 = arith.constant 0 : index
    %c0_57 = arith.constant 0 : index
    %205 = vector.load %arg13[%c0_56, %c0_57] : memref<8x32xf32, #tpu.memory_space<vmem>>, vector<8x32xf32>
    tpu.vector_store %arg13[%c0_56, %c0_57], %198 {strides = array<i32>} : memref<8x32xf32, #tpu.memory_space<vmem>>, vector<8x32xf32>,
    %c0_58 = arith.constant 0 : index
    %c0_59 = arith.constant 0 : index
    %206 = vector.load %arg14[%c0_58, %c0_59] : memref<64x32xf32, #tpu.memory_space<vmem>>, vector<64x32xf32>
    %207 = arith.truncf %206 : vector<64x32xf32> to vector<64x32xbf16>
    %c0_60 = arith.constant 0 : index
    %c0_61 = arith.constant 0 : index
    %208 = vector.load %arg9[%c0_60, %c0_61] : memref<32x128xbf16, #tpu.memory_space<vmem>>, vector<32x128xbf16>
    %cst_62 = arith.constant dense<0.000000e+00> : vector<64x128xf32>
    %209 = tpu.matmul %207, %208, %cst_62 {dimension_numbers = #tpu.dot_dimension_numbers<[1], [0], [0], [1], [0, 0, 1, 1], [], []>} : vector<64x32xbf16>, vector<32x128xbf16>, vector<64x128xf32> -> vector<64x128xf32>
    %c0_63 = arith.constant 0 : index
    %c0_64 = arith.constant 0 : index
    %210 = vector.load %arg10[%c0_63, %c0_64] : memref<1x128xf32, #tpu.memory_space<vmem>>, vector<1x128xf32>
    %211 = vector.broadcast %210 : vector<1x128xf32> to vector<64x128xf32>
    %212 = arith.addf %209, %211 : vector<64x128xf32>
    %c0_65 = arith.constant 0 : index
    %c0_66 = arith.constant 0 : index
    %c0_67 = arith.constant 0 : index
    %213 = vector.load %arg11[%c0_65, %c0_66, %c0_67] : memref<1x64x128xf32, #tpu.memory_space<vmem>>, vector<1x64x128xf32>
    %214 = vector.shape_cast %213 : vector<1x64x128xf32> to vector<64x128xf32>
    %215 = vector.shape_cast %212 : vector<64x128xf32> to vector<1x64x128xf32>
    tpu.vector_store %arg11[%c0_65, %c0_66, %c0_67], %215 {strides = array<i32>} : memref<1x64x128xf32, #tpu.memory_space<vmem>>, vector<1x64x128xf32>,
    return
  }
  func.func @transform_0(%arg0: i32, %arg1: i32) -> (i32, i32, i32) {
    %c0_i32 = arith.constant 0 : i32
    %c0_i32_0 = arith.constant 0 : i32
    return %arg0, %arg1, %c0_i32 : i32, i32, i32
  }
  func.func @transform_1(%arg0: i32, %arg1: i32) -> (i32, i32, i32) {
    %c0_i32 = arith.constant 0 : i32
    %c0_i32_0 = arith.constant 0 : i32
    return %arg0, %arg1, %c0_i32 : i32, i32, i32
  }
  func.func @transform_2(%arg0: i32, %arg1: i32) -> (i32, i32) {
    %c0_i32 = arith.constant 0 : i32
    %c0_i32_0 = arith.constant 0 : i32
    %c0_i32_1 = arith.constant 0 : i32
    return %c0_i32, %c0_i32_0 : i32, i32
  }
  func.func @transform_3(%arg0: i32, %arg1: i32) -> (i32, i32) {
    %c0_i32 = arith.constant 0 : i32
    %c0_i32_0 = arith.constant 0 : i32
    %c0_i32_1 = arith.constant 0 : i32
    return %c0_i32, %c0_i32_0 : i32, i32
  }
  func.func @transform_4(%arg0: i32, %arg1: i32) -> (i32, i32) {
    %c0_i32 = arith.constant 0 : i32
    %c0_i32_0 = arith.constant 0 : i32
    %c0_i32_1 = arith.constant 0 : i32
    return %c0_i32, %c0_i32_0 : i32, i32
  }
  func.func @transform_5(%arg0: i32, %arg1: i32) -> (i32, i32) {
    %c0_i32 = arith.constant 0 : i32
    %c0_i32_0 = arith.constant 0 : i32
    %c0_i32_1 = arith.constant 0 : i32
    return %c0_i32, %c0_i32_0 : i32, i32
  }
  func.func @transform_6(%arg0: i32, %arg1: i32) -> (i32, i32) {
    %c0_i32 = arith.constant 0 : i32
    %c0_i32_0 = arith.constant 0 : i32
    %c0_i32_1 = arith.constant 0 : i32
    return %c0_i32, %c0_i32_0 : i32, i32
  }
  func.func @transform_7(%arg0: i32, %arg1: i32) -> (i32, i32) {
    %c0_i32 = arith.constant 0 : i32
    %c0_i32_0 = arith.constant 0 : i32
    %c0_i32_1 = arith.constant 0 : i32
    return %c0_i32, %c0_i32_0 : i32, i32
  }
  func.func @transform_8(%arg0: i32, %arg1: i32) -> (i32, i32) {
    %c0_i32 = arith.constant 0 : i32
    %c0_i32_0 = arith.constant 0 : i32
    %c0_i32_1 = arith.constant 0 : i32
    return %c0_i32, %c0_i32_0 : i32, i32
  }
  func.func @transform_9(%arg0: i32, %arg1: i32) -> (i32, i32, i32) {
    %c0_i32 = arith.constant 0 : i32
    %c0_i32_0 = arith.constant 0 : i32
    return %arg0, %arg1, %c0_i32 : i32, i32, i32
  }
  func.func @transform_10(%arg0: i32, %arg1: i32) -> (i32, i32) {
    %c0_i32 = arith.constant 0 : i32
    %c0_i32_0 = arith.constant 0 : i32
    return %arg0, %c0_i32 : i32, i32
  }
  func.func @transform_11(%arg0: i32, %arg1: i32) -> (i32, i32) {
    %c0_i32 = arith.constant 0 : i32
    %c0_i32_0 = arith.constant 0 : i32
    return %arg0, %c0_i32 : i32, i32
  }
}

</mosaic_0001>

<llo_original>
// kernel: tpu_custom_call.1
$region0: #{tpu_custom_call.1}
  #allocation0 [shape = 'u32[]', space=smem, size = 0x4, offset = 0x4, fixed_abs, tag = 'smem constant byte address 0x4 - core index']
  #allocation1 [shape = 'u32[144,128]{1,0:T(1,128)}', space=vmem, size = 0x12000, scoped, tag = 'internal scratch']
  #allocation2 [shape = 'f32[64,32]{1,0:T(8,128)}', space=vmem, size = 0x8000, scoped, tag = 'scratch operand']
  #allocation3 [shape = 'f32[8,32]{1,0:T(8,128)}', space=vmem, size = 0x1000, scoped, tag = 'scratch operand']
  #allocation4 [shape = 'f32[8,32]{1,0:T(8,128)}', space=vmem, size = 0x1000, scoped, tag = 'scratch operand']
  %s0 = inlined_call_operand.vmem [shape: f32[1,64,32], index: 0, kind: input, shape index: {}]
  %s1 = inlined_call_operand.vmem [shape: f32[1,64,1], index: 1, kind: input, shape index: {}]
  %s2 = inlined_call_operand.vmem [shape: f32[1,32], index: 2, kind: input, shape index: {}]
  %s3 = inlined_call_operand.vmem [shape: f32[1,32], index: 3, kind: input, shape index: {}]
  %s4 = inlined_call_operand.vmem [shape: bf16[32,128], index: 4, kind: input, shape index: {}]
  %s5 = inlined_call_operand.vmem [shape: bf16[32,128], index: 5, kind: input, shape index: {}]
  %s6 = inlined_call_operand.vmem [shape: f32[1,128], index: 6, kind: input, shape index: {}]
  %s7 = inlined_call_operand.vmem [shape: bf16[32,128], index: 7, kind: input, shape index: {}]
  %s8 = inlined_call_operand.vmem [shape: f32[1,128], index: 8, kind: input, shape index: {}]
  %s9 = inlined_call_operand.hbm [shape: f32[1,64,128], index: 9, kind: output, shape index: {0}]
  %s10 = inlined_call_operand.hbm [shape: f32[8,32], index: 10, kind: output, shape index: {1}]
  %s11 = inlined_call_operand.hbm [shape: f32[8,32], index: 11, kind: output, shape index: {2}]
  %12 = xla_tuple %s9, %s10, %s11
  %s13 = sld [smem:[#allocation0]]
  $region66: #{tpu_custom_call.1} parent=0
    _
  %s15 = ssub.s32 1, %s13
  %s16 = scalar_select 0, %s15, %s13
  $region1: #{tpu_custom_call.1} parent=0
    #allocation5 [shape = 'u8[32768]{0}', space=vmem, size = 0x8000, scoped, tag = 'output window, operand 0, single buffered']
    #allocation6 [shape = 's32[1]{0}', space=sflag, size = 0x4, scoped, tag = 'scoped memory for tpu_custom_call.1']
    #allocation7 [shape = 'u8[4096]{0}', space=vmem, size = 0x1000, scoped, tag = 'output window, operand 1, single buffered']
    #allocation8 [shape = 's32[1]{0}', space=sflag, size = 0x4, scoped, tag = 'scoped memory for tpu_custom_call.1']
    #allocation9 [shape = 'u8[4096]{0}', space=vmem, size = 0x1000, scoped, tag = 'output window, operand 2, single buffered']
    %17 = vsyncpa [#allocation6], 0
    %18 = vsyncpa [#allocation8], 0
    // Predicated region
    $region2: #{tpu_custom_call.1} parent=1 // pred_check
      _
    $region3: #{tpu_custom_call.1} parent=1 // pred_check_branch
      %20 = sbr.rel (0) target = $region5
    $region4: #{tpu_custom_call.1} parent=1 // pred_region
      _
    $region5: #{tpu_custom_call.1} parent=1 // pred_fallthru
      _
    // Predicated region
    $region6: #{tpu_custom_call.1} parent=1 // pred_check
      _
    $region7: #{tpu_custom_call.1} parent=1 // pred_check_branch
      %22 = sbr.rel (0) target = $region9
    $region8: #{tpu_custom_call.1} parent=1 // pred_region
      _
    $region9: #{tpu_custom_call.1} parent=1 // pred_fallthru
      _
    // Predicated region
    $region10: #{tpu_custom_call.1} parent=1 // pred_check
      _
    $region11: #{tpu_custom_call.1} parent=1 // pred_check_branch
      %24 = sbr.rel (0) target = $region13
    $region12: #{tpu_custom_call.1} parent=1 // pred_region
      _
    $region13: #{tpu_custom_call.1} parent=1 // pred_fallthru
      _
    // Predicated region
    $region14: #{tpu_custom_call.1} parent=1 // pred_check
      _
    $region15: #{tpu_custom_call.1} parent=1 // pred_check_branch
      %26 = sbr.rel (0) target = $region17
    $region16: #{tpu_custom_call.1} parent=1 // pred_region
      _
    $region17: #{tpu_custom_call.1} parent=1 // pred_fallthru
      _
    // Predicated region
    $region18: #{tpu_custom_call.1} parent=1 // pred_check
      _
    $region19: #{tpu_custom_call.1} parent=1 // pred_check_branch
      %28 = sbr.rel (0) target = $region21
    $region20: #{tpu_custom_call.1} parent=1 // pred_region
      _
    $region21: #{tpu_custom_call.1} parent=1 // pred_fallthru
      _
    // Predicated region
    $region22: #{tpu_custom_call.1} parent=1 // pred_check
      _
    $region23: #{tpu_custom_call.1} parent=1 // pred_check_branch
      %30 = sbr.rel (0) target = $region25
    $region24: #{tpu_custom_call.1} parent=1 // pred_region
      _
    $region25: #{tpu_custom_call.1} parent=1 // pred_fallthru
      _
    // Predicated region
    $region26: #{tpu_custom_call.1} parent=1 // pred_check
      _
    $region27: #{tpu_custom_call.1} parent=1 // pred_check_branch
      %32 = sbr.rel (0) target = $region29
    $region28: #{tpu_custom_call.1} parent=1 // pred_region
      _
    $region29: #{tpu_custom_call.1} parent=1 // pred_fallthru
      _
    // Predicated region
    $region30: #{tpu_custom_call.1} parent=1 // pred_check
      _
    $region31: #{tpu_custom_call.1} parent=1 // pred_check_branch
      %34 = sbr.rel (0) target = $region33
    $region32: #{tpu_custom_call.1} parent=1 // pred_region
      _
    $region33: #{tpu_custom_call.1} parent=1 // pred_fallthru
      _
    // Predicated region
    $region34: #{tpu_custom_call.1} parent=1 // pred_check
      _
    $region35: #{tpu_custom_call.1} parent=1 // pred_check_branch
      %36 = sbr.rel (0) target = $region37
    $region36: #{tpu_custom_call.1} parent=1 // pred_region
      _
    $region37: #{tpu_custom_call.1} parent=1 // pred_fallthru
      _
    %p38 = scmp.eq.s32.totalorder 0, 0
    // Predicated region
    $region38: #{tpu_custom_call.1} parent=1 // pred_check
      %p39 = pneg %p38
    $region39: #{tpu_custom_call.1} parent=1 // pred_check_branch
      %41 = sbr.rel (%p39) target = $region41
    $region40: #{tpu_custom_call.1} parent=1 // pred_region
      %vm42 = vcmask 261120
      %43 = vst.msk [vmem:[#allocation3] sm:$0xff] %vm42, 0.0
      %44 = vst.msk [vmem:[#allocation4] sm:$0xff] %vm42, 0.0
    $region41: #{tpu_custom_call.1} parent=1 // pred_fallthru
      _
    %v45 = vld [vmem:[%s0] sm:$0xff]
    %v46 = vld [vmem:[%s0 + $0x8] sm:$0xff]
    %v47 = vld [vmem:[%s0 + $0x10] sm:$0xff]
    %v48 = vld [vmem:[%s0 + $0x18] sm:$0xff]
    %v49 = vld [vmem:[%s0 + $0x20] sm:$0xff]
    %v50 = vld [vmem:[%s0 + $0x28] sm:$0xff]
    %v51 = vld [vmem:[%s0 + $0x30] sm:$0xff]
    %v52 = vld [vmem:[%s0 + $0x38] sm:$0xff]
    %vm53 = vcmask 261120
    %v54 = vsel %vm53, %v45, 0.0
    %55 = vadd.xlane.f32.xlu0 %v54
    %v56 = vpop.xlane.xlu0 %55
    %v57 = vsel %vm53, %v46, 0.0
    %58 = vadd.xlane.f32.xlu0 %v57
    %v59 = vpop.xlane.xlu0 %58
    %v60 = vsel %vm53, %v47, 0.0
    %61 = vadd.xlane.f32.xlu0 %v60
    %v62 = vpop.xlane.xlu0 %61
    %v63 = vsel %vm53, %v48, 0.0
    %64 = vadd.xlane.f32.xlu0 %v63
    %v65 = vpop.xlane.xlu0 %64
    %v66 = vsel %vm53, %v49, 0.0
    %67 = vadd.xlane.f32.xlu0 %v66
    %v68 = vpop.xlane.xlu0 %67
    %v69 = vsel %vm53, %v50, 0.0
    %70 = vadd.xlane.f32.xlu0 %v69
    %v71 = vpop.xlane.xlu0 %70
    %v72 = vsel %vm53, %v51, 0.0
    %73 = vadd.xlane.f32.xlu0 %v72
    %v74 = vpop.xlane.xlu0 %73
    %v75 = vsel %vm53, %v52, 0.0
    %76 = vadd.xlane.f32.xlu0 %v75
    %v77 = vpop.xlane.xlu0 %76
    %v78 = vrcp.pop 32.0
    %v79 = vmul.f32 %v56, %v78
    %v80 = vmul.f32 %v59, %v78
    %v81 = vmul.f32 %v62, %v78
    %v82 = vmul.f32 %v65, %v78
    %v83 = vmul.f32 %v68, %v78
    %v84 = vmul.f32 %v71, %v78
    %v85 = vmul.f32 %v74, %v78
    %v86 = vmul.f32 %v77, %v78
    %v87 = vsub.f32 %v45, %v79
    %v88 = vsub.f32 %v46, %v80
    %v89 = vsub.f32 %v47, %v81
    %v90 = vsub.f32 %v48, %v82
    %v91 = vsub.f32 %v49, %v83
    %v92 = vsub.f32 %v50, %v84
    %v93 = vsub.f32 %v51, %v85
    %v94 = vsub.f32 %v52, %v86
    %v95 = vmul.f32 %v87, %v87
    %v96 = vmul.f32 %v88, %v88
    %v97 = vmul.f32 %v89, %v89
    %v98 = vmul.f32 %v90, %v90
    %v99 = vmul.f32 %v91, %v91
    %v100 = vmul.f32 %v92, %v92
    %v101 = vmul.f32 %v93, %v93
    %v102 = vmul.f32 %v94, %v94
    %v103 = vsel %vm53, %v95, 0.0
    %104 = vadd.xlane.f32.xlu0 %v103
    %v105 = vpop.xlane.xlu0 %104
    %v106 = vsel %vm53, %v96, 0.0
    %107 = vadd.xlane.f32.xlu0 %v106
    %v108 = vpop.xlane.xlu0 %107
    %v109 = vsel %vm53, %v97, 0.0
    %110 = vadd.xlane.f32.xlu0 %v109
    %v111 = vpop.xlane.xlu0 %110
    %v112 = vsel %vm53, %v98, 0.0
    %113 = vadd.xlane.f32.xlu0 %v112
    %v114 = vpop.xlane.xlu0 %113
    %v115 = vsel %vm53, %v99, 0.0
    %116 = vadd.xlane.f32.xlu0 %v115
    %v117 = vpop.xlane.xlu0 %116
    %v118 = vsel %vm53, %v100, 0.0
    %119 = vadd.xlane.f32.xlu0 %v118
    %v120 = vpop.xlane.xlu0 %119
    %v121 = vsel %vm53, %v101, 0.0
    %122 = vadd.xlane.f32.xlu0 %v121
    %v123 = vpop.xlane.xlu0 %122
    %v124 = vsel %vm53, %v102, 0.0
    %125 = vadd.xlane.f32.xlu0 %v124
    %v126 = vpop.xlane.xlu0 %125
    %v127 = vmul.f32 %v105, %v78
    %v128 = vmul.f32 %v108, %v78
    %v129 = vmul.f32 %v111, %v78
    %v130 = vmul.f32 %v114, %v78
    %v131 = vmul.f32 %v117, %v78
    %v132 = vmul.f32 %v120, %v78
    %v133 = vmul.f32 %v123, %v78
    %v134 = vmul.f32 %v126, %v78
    %v135 = vadd.f32 %v127, 1e-12
    %v136 = vadd.f32 %v128, 1e-12
    %v137 = vadd.f32 %v129, 1e-12
    %v138 = vadd.f32 %v130, 1e-12
    %v139 = vadd.f32 %v131, 1e-12
    %v140 = vadd.f32 %v132, 1e-12
    %v141 = vadd.f32 %v133, 1e-12
    %v142 = vadd.f32 %v134, 1e-12
    %v143 = vrsqrt.pop %v135
    %v144 = vrsqrt.pop %v136
    %v145 = vrsqrt.pop %v137
    %v146 = vrsqrt.pop %v138
    %v147 = vrsqrt.pop %v139
    %v148 = vrsqrt.pop %v140
    %v149 = vrsqrt.pop %v141
    %v150 = vrsqrt.pop %v142
    %v151 = vmul.f32 %v87, %v143
    %v152 = vmul.f32 %v88, %v144
    %v153 = vmul.f32 %v89, %v145
    %v154 = vmul.f32 %v90, %v146
    %v155 = vmul.f32 %v91, %v147
    %v156 = vmul.f32 %v92, %v148
    %v157 = vmul.f32 %v93, %v149
    %v158 = vmul.f32 %v94, %v150
    %v159 = vld [vmem:[%s2] sm:$0x1]
    %v161 = vlaneseq
    %v162 = vshrl.u32 %v161, 7
    %v163 = vsub.s32 0, %v162
    %v164 = vrot.slane %v159, %v163
    %v166 = vmul.f32 %v151, %v164
    %v167 = vmul.f32 %v152, %v164
    %v168 = vmul.f32 %v153, %v164
    %v169 = vmul.f32 %v154, %v164
    %v170 = vmul.f32 %v155, %v164
    %v171 = vmul.f32 %v156, %v164
    %v172 = vmul.f32 %v157, %v164
    %v173 = vmul.f32 %v158, %v164
    %v174 = vld [vmem:[%s3] sm:$0x1]
    %v176 = vlaneseq
    %v177 = vshrl.u32 %v176, 7
    %v178 = vsub.s32 0, %v177
    %v179 = vrot.slane %v174, %v178
    %v181 = vadd.f32 %v166, %v179
    %v182 = vadd.f32 %v167, %v179
    %v183 = vadd.f32 %v168, %v179
    %v184 = vadd.f32 %v169, %v179
    %v185 = vadd.f32 %v170, %v179
    %v186 = vadd.f32 %v171, %v179
    %v187 = vadd.f32 %v172, %v179
    %v188 = vadd.f32 %v173, %v179
    %v189 = vld [vmem:[%s1] sm:$0xff]
    %v190 = vld [vmem:[%s1 + $0x8] sm:$0xff]
    %v191 = vld [vmem:[%s1 + $0x10] sm:$0xff]
    %v192 = vld [vmem:[%s1 + $0x18] sm:$0xff]
    %v193 = vld [vmem:[%s1 + $0x20] sm:$0xff]
    %v194 = vld [vmem:[%s1 + $0x28] sm:$0xff]
    %v195 = vld [vmem:[%s1 + $0x30] sm:$0xff]
    %v196 = vld [vmem:[%s1 + $0x38] sm:$0xff]
    %198 = vset.pattern.permute.xlu0 0
    %199 = vperm.xlu0 %198, %v189
    %v200 = vpop.permute.xlu0 %199
    %203 = vset.pattern.permute.xlu0 0
    %204 = vperm.xlu0 %203, %v190
    %v205 = vpop.permute.xlu0 %204
    %208 = vset.pattern.permute.xlu0 0
    %209 = vperm.xlu0 %208, %v191
    %v210 = vpop.permute.xlu0 %209
    %213 = vset.pattern.permute.xlu0 0
    %214 = vperm.xlu0 %213, %v192
    %v215 = vpop.permute.xlu0 %214
    %218 = vset.pattern.permute.xlu0 0
    %219 = vperm.xlu0 %218, %v193
    %v220 = vpop.permute.xlu0 %219
    %223 = vset.pattern.permute.xlu0 0
    %224 = vperm.xlu0 %223, %v194
    %v225 = vpop.permute.xlu0 %224
    %228 = vset.pattern.permute.xlu0 0
    %229 = vperm.xlu0 %228, %v195
    %v230 = vpop.permute.xlu0 %229
    %233 = vset.pattern.permute.xlu0 0
    %234 = vperm.xlu0 %233, %v196
    %v235 = vpop.permute.xlu0 %234
    %v237 = vmul.f32 %v181, %v200
    %v238 = vmul.f32 %v182, %v205
    %v239 = vmul.f32 %v183, %v210
    %v240 = vmul.f32 %v184, %v215
    %v241 = vmul.f32 %v185, %v220
    %v242 = vmul.f32 %v186, %v225
    %v243 = vmul.f32 %v187, %v230
    %v244 = vmul.f32 %v188, %v235
    %v245 = vpack.c.bf16 %v238, %v237
    %v246 = vpack.c.bf16 %v240, %v239
    %v247 = vpack.c.bf16 %v242, %v241
    %v248 = vpack.c.bf16 %v244, %v243
    %v249 = vld [vmem:[%s4] sm:$0xf]
    %v250 = vld [vmem:[%s4 + $0x4] sm:$0xf]
    %v251 = vld [vmem:[%s4 + $0x8] sm:$0xf]
    %v252 = vld [vmem:[%s4 + $0xc] sm:$0xf]
    %v253 = vld [vmem:[%s6] sm:$0x1]
    %v255 = vlaneseq
    %v256 = vshrl.u32 %v255, 7
    %v257 = vsub.s32 0, %v256
    %v258 = vrot.slane %v253, %v257
    %v264 = vunpack.c.l.b16 %v249
    %v265 = vunpack.c.l.b16 %v250
    %v266 = vunpack.c.l.b16 %v251
    %v267 = vunpack.c.l.b16 %v252
    %v268 = vpack.c.b16 %v265, %v264
    %v269 = vpack.c.b16 %v267, %v266
    %v273 = vsel %vm53, %v245, 0
    %v276 = vsel %vm53, %v246, 0
    %v279 = vsel %vm53, %v247, 0
    %v282 = vsel %vm53, %v248, 0
    %284 = vmatprep.subr.bf16.mxu0 0
    %285 = vmatpush1.bf16.msra.mxu0 %v268
    %286 = vmatprep.subr.bf16.mxu0 0
    %287 = vmatpush1.bf16.msra.mxu0 %v269
    %288 = vmatprep.subr.bf16.mxu0 0
    %289 = vmatpush1.bf16.msra.mxu0 0
    %290 = vmatprep.subr.bf16.mxu0 0
    %291 = vmatpush1.bf16.msra.mxu0 0
    %292 = vmatprep.subr.bf16.mxu0 0
    %293 = vmatpush1.bf16.msra.mxu0 0
    %294 = vmatprep.subr.bf16.mxu0 0
    %295 = vmatpush1.bf16.msra.mxu0 0
    %296 = vmatprep.subr.bf16.mxu0 0
    %297 = vmatpush1.bf16.msra.mxu0 0
    %298 = vmatprep.subr.bf16.mxu0 0
    %299 = vmatpush1.bf16.msra.mxu0 0
    %300 = vmatprep.subr.bf16.mxu0 0
    %301 = vmatpush1.bf16.msra.mxu0 0
    %302 = vmatprep.subr.bf16.mxu0 0
    %303 = vmatpush1.bf16.msra.mxu0 0
    %304 = vmatprep.subr.bf16.mxu0 0
    %305 = vmatpush1.bf16.msra.mxu0 0
    %306 = vmatprep.subr.bf16.mxu0 0
    %307 = vmatpush1.bf16.msra.mxu0 0
    %308 = vmatprep.subr.bf16.mxu0 0
    %309 = vmatpush1.bf16.msra.mxu0 0
    %310 = vmatprep.subr.bf16.mxu0 0
    %311 = vmatpush1.bf16.msra.mxu0 0
    %312 = vmatprep.subr.bf16.mxu0 0
    %313 = vmatpush1.bf16.msra.mxu0 0
    %314 = vmatprep.subr.bf16.mxu0 0
    %315 = vmatpush1.bf16.msra.mxu0 0
    %316 = vmatprep.mubr.bf16.mxu0 0
    %317 = vmatmul.mubr.bf16.gmra.mrb[0].mxu0 %v273
    %v318 = vpop.f32.mrb[0].mxu0
    %v319 = vadd.f32 %v258, %v318
    %v320 = vpop.f32.mrb[0].mxu0
    %v321 = vpop.f32.mrb[0].mxu0
    %v322 = vadd.f32 %v258, %v321
    %v323 = vpop.f32.mrb[0].mxu0
    %324 = vmatprep.mubr.bf16.mxu0 0
    %325 = vmatmul.mubr.bf16.gmra.mrb[0].mxu0 %v276
    %v326 = vpop.f32.mrb[0].mxu0
    %v327 = vadd.f32 %v258, %v326
    %v328 = vpop.f32.mrb[0].mxu0
    %v329 = vpop.f32.mrb[0].mxu0
    %v330 = vadd.f32 %v258, %v329
    %v331 = vpop.f32.mrb[0].mxu0
    %332 = vmatprep.mubr.bf16.mxu0 0
    %333 = vmatmul.mubr.bf16.gmra.mrb[0].mxu0 %v279
    %v334 = vpop.f32.mrb[0].mxu0
    %v335 = vadd.f32 %v258, %v334
    %v336 = vpop.f32.mrb[0].mxu0
    %v337 = vpop.f32.mrb[0].mxu0
    %v338 = vadd.f32 %v258, %v337
    %v339 = vpop.f32.mrb[0].mxu0
    %340 = vmatprep.mubr.bf16.mxu0 0
    %341 = vmatmul.mubr.bf16.gmra.mrb[0].mxu0 %v282
    %v342 = vpop.f32.mrb[0].mxu0
    %v343 = vadd.f32 %v258, %v342
    %v344 = vpop.f32.mrb[0].mxu0
    %v345 = vpop.f32.mrb[0].mxu0
    %v346 = vadd.f32 %v258, %v345
    %v347 = vpop.f32.mrb[0].mxu0
    %348 = vdwg.mxu0
    %v349 = vld [vmem:[%s5] sm:$0xf]
    %v350 = vld [vmem:[%s5 + $0x4] sm:$0xf]
    %v351 = vld [vmem:[%s5 + $0x8] sm:$0xf]
    %v352 = vld [vmem:[%s5 + $0xc] sm:$0xf]
    %v353 = vld [vmem:[#allocation3] sm:$0xff]
    %v354 = vld [vmem:[#allocation4] sm:$0xff]
    %v355 = vpack.c.bf16 %v353, %v353
    %v360 = vunpack.c.l.b16 %v349
    %v361 = vunpack.c.l.b16 %v350
    %v362 = vunpack.c.l.b16 %v351
    %v363 = vunpack.c.l.b16 %v352
    %v364 = vpack.c.b16 %v361, %v360
    %v365 = vpack.c.b16 %v363, %v362
    %v369 = vsel %vm53, %v355, 0
    %371 = vmatprep.subr.bf16.mxu0 0
    %372 = vmatpush1.bf16.msra.mxu0 %v364
    %373 = vmatprep.subr.bf16.mxu0 0
    %374 = vmatpush1.bf16.msra.mxu0 %v365
    %375 = vmatprep.subr.bf16.mxu0 0
    %376 = vmatpush1.bf16.msra.mxu0 0
    %377 = vmatprep.subr.bf16.mxu0 0
    %378 = vmatpush1.bf16.msra.mxu0 0
    %379 = vmatprep.subr.bf16.mxu0 0
    %380 = vmatpush1.bf16.msra.mxu0 0
    %381 = vmatprep.subr.bf16.mxu0 0
    %382 = vmatpush1.bf16.msra.mxu0 0
    %383 = vmatprep.subr.bf16.mxu0 0
    %384 = vmatpush1.bf16.msra.mxu0 0
    %385 = vmatprep.subr.bf16.mxu0 0
    %386 = vmatpush1.bf16.msra.mxu0 0
    %387 = vmatprep.subr.bf16.mxu0 0
    %388 = vmatpush1.bf16.msra.mxu0 0
    %389 = vmatprep.subr.bf16.mxu0 0
    %390 = vmatpush1.bf16.msra.mxu0 0
    %391 = vmatprep.subr.bf16.mxu0 0
    %392 = vmatpush1.bf16.msra.mxu0 0
    %393 = vmatprep.subr.bf16.mxu0 0
    %394 = vmatpush1.bf16.msra.mxu0 0
    %395 = vmatprep.subr.bf16.mxu0 0
    %396 = vmatpush1.bf16.msra.mxu0 0
    %397 = vmatprep.subr.bf16.mxu0 0
    %398 = vmatpush1.bf16.msra.mxu0 0
    %399 = vmatprep.subr.bf16.mxu0 0
    %400 = vmatpush1.bf16.msra.mxu0 0
    %401 = vmatprep.subr.bf16.mxu0 0
    %402 = vmatpush1.bf16.msra.mxu0 0
    %403 = vmatprep.mubr.bf16.mxu0 0
    %404 = vmatmul.mubr.bf16.gmra.mrb[0].mxu0 %v369
    %v405 = vpop.f32.mrb[0].mxu0
    %v406 = vadd.f32 0.0, %v405
    %v407 = vpop.f32.mrb[0].mxu0
    %v408 = vpop.f32.mrb[0].mxu0
    %v409 = vpop.f32.mrb[0].mxu0
    %410 = vdwg.mxu0
    %v411 = vadd.f32 %v319, %v406
    %v412 = vxor.u32 %v411, 2147483648
    %v413 = vmul.f32 %v412, 1.442695
    %v414 = vpow.pop %v413
    %v415 = vadd.f32 %v414, 1.0
    %v416 = vrcp.pop %v415
    %v417 = vmul.f32 1.0, %v416
    %v418 = vtanh.pop %v411
    %420 = vrot.lane.b32.xlu0 %v354, 32
    %v421 = vpop.permute.xlu0 %420
    %v423 = vmul.f32 %v417, %v421
    %425 = vrot.lane.b32.xlu0 %v418, 64
    %v426 = vpop.permute.xlu0 %425
    %v428 = vmul.f32 %v417, %v426
    %430 = vrot.lane.b32.xlu0 %v428, 32
    %v431 = vpop.permute.xlu0 %430
    %v433 = vadd.f32 %v423, %v431
    %v434 = vtanh.pop %v433
    %436 = vrot.lane.b32.xlu0 %v434, 64
    %v437 = vpop.permute.xlu0 %436
    %v439 = vmul.f32 %v417, %v437
    %441 = vrot.lane.b32.xlu0 %v439, 32
    %v442 = vpop.permute.xlu0 %441
    %444 = vst.msk [vmem:[#allocation2] sm:$0xff] %vm53, %v442
    %v445 = vpack.c.bf16 %v439, %v439
    %447 = vrot.lane.b32.xlu0 %v445, 32
    %v448 = vpop.permute.xlu0 %447
    %v450 = vsel %vm53, %v448, 0
    %452 = vmatprep.subr.bf16.mxu0 0
    %453 = vmatpush1.bf16.msra.mxu0 %v364
    %454 = vmatprep.subr.bf16.mxu0 0
    %455 = vmatpush1.bf16.msra.mxu0 %v365
    %456 = vmatprep.subr.bf16.mxu0 0
    %457 = vmatpush1.bf16.msra.mxu0 0
    %458 = vmatprep.subr.bf16.mxu0 0
    %459 = vmatpush1.bf16.msra.mxu0 0
    %460 = vmatprep.subr.bf16.mxu0 0
    %461 = vmatpush1.bf16.msra.mxu0 0
    %462 = vmatprep.subr.bf16.mxu0 0
    %463 = vmatpush1.bf16.msra.mxu0 0
    %464 = vmatprep.subr.bf16.mxu0 0
    %465 = vmatpush1.bf16.msra.mxu0 0
    %466 = vmatprep.subr.bf16.mxu0 0
    %467 = vmatpush1.bf16.msra.mxu0 0
    %468 = vmatprep.subr.bf16.mxu0 0
    %469 = vmatpush1.bf16.msra.mxu0 0
    %470 = vmatprep.subr.bf16.mxu0 0
    %471 = vmatpush1.bf16.msra.mxu0 0
    %472 = vmatprep.subr.bf16.mxu0 0
    %473 = vmatpush1.bf16.msra.mxu0 0
    %474 = vmatprep.subr.bf16.mxu0 0
    %475 = vmatpush1.bf16.msra.mxu0 0
    %476 = vmatprep.subr.bf16.mxu0 0
    %477 = vmatpush1.bf16.msra.mxu0 0
    %478 = vmatprep.subr.bf16.mxu0 0
    %479 = vmatpush1.bf16.msra.mxu0 0
    %480 = vmatprep.subr.bf16.mxu0 0
    %481 = vmatpush1.bf16.msra.mxu0 0
    %482 = vmatprep.subr.bf16.mxu0 0
    %483 = vmatpush1.bf16.msra.mxu0 0
    %484 = vmatprep.mubr.bf16.mxu0 0
    %485 = vmatmul.mubr.bf16.gmra.mrb[0].mxu0 %v450
    %v486 = vpop.f32.mrb[0].mxu0
    %v487 = vadd.f32 0.0, %v486
    %v488 = vpop.f32.mrb[0].mxu0
    %v489 = vpop.f32.mrb[0].mxu0
    %v490 = vpop.f32.mrb[0].mxu0
    %491 = vdwg.mxu0
    %v492 = vadd.f32 %v322, %v487
    %v493 = vxor.u32 %v492, 2147483648
    %v494 = vmul.f32 %v493, 1.442695
    %v495 = vpow.pop %v494
    %v496 = vadd.f32 %v495, 1.0
    %v497 = vrcp.pop %v496
    %v498 = vmul.f32 1.0, %v497
    %v499 = vtanh.pop %v492
    %v500 = vmul.f32 %v498, %v433
    %502 = vrot.lane.b32.xlu0 %v499, 64
    %v503 = vpop.permute.xlu0 %502
    %v505 = vmul.f32 %v498, %v503
    %507 = vrot.lane.b32.xlu0 %v505, 32
    %v508 = vpop.permute.xlu0 %507
    %v510 = vadd.f32 %v500, %v508
    %v511 = vtanh.pop %v510
    %513 = vrot.lane.b32.xlu0 %v511, 64
    %v514 = vpop.permute.xlu0 %513
    %v516 = vmul.f32 %v498, %v514
    %518 = vrot.lane.b32.xlu0 %v516, 32
    %v519 = vpop.permute.xlu0 %518
    %521 = vst.msk [vmem:[#allocation2 + $0x8] sm:$0xff] %vm53, %v519
    %v522 = vpack.c.bf16 %v516, %v516
    %524 = vrot.lane.b32.xlu0 %v522, 32
    %v525 = vpop.permute.xlu0 %524
    %v527 = vsel %vm53, %v525, 0
    %529 = vmatprep.subr.bf16.mxu0 0
    %530 = vmatpush1.bf16.msra.mxu0 %v364
    %531 = vmatprep.subr.bf16.mxu0 0
    %532 = vmatpush1.bf16.msra.mxu0 %v365
    %533 = vmatprep.subr.bf16.mxu0 0
    %534 = vmatpush1.bf16.msra.mxu0 0
    %535 = vmatprep.subr.bf16.mxu0 0
    %536 = vmatpush1.bf16.msra.mxu0 0
    %537 = vmatprep.subr.bf16.mxu0 0
    %538 = vmatpush1.bf16.msra.mxu0 0
    %539 = vmatprep.subr.bf16.mxu0 0
    %540 = vmatpush1.bf16.msra.mxu0 0
    %541 = vmatprep.subr.bf16.mxu0 0
    %542 = vmatpush1.bf16.msra.mxu0 0
    %543 = vmatprep.subr.bf16.mxu0 0
    %544 = vmatpush1.bf16.msra.mxu0 0
    %545 = vmatprep.subr.bf16.mxu0 0
    %546 = vmatpush1.bf16.msra.mxu0 0
    %547 = vmatprep.subr.bf16.mxu0 0
    %548 = vmatpush1.bf16.msra.mxu0 0
    %549 = vmatprep.subr.bf16.mxu0 0
    %550 = vmatpush1.bf16.msra.mxu0 0
    %551 = vmatprep.subr.bf16.mxu0 0
    %552 = vmatpush1.bf16.msra.mxu0 0
    %553 = vmatprep.subr.bf16.mxu0 0
    %554 = vmatpush1.bf16.msra.mxu0 0
    %555 = vmatprep.subr.bf16.mxu0 0
    %556 = vmatpush1.bf16.msra.mxu0 0
    %557 = vmatprep.subr.bf16.mxu0 0
    %558 = vmatpush1.bf16.msra.mxu0 0
    %559 = vmatprep.subr.bf16.mxu0 0
    %560 = vmatpush1.bf16.msra.mxu0 0
    %561 = vmatprep.mubr.bf16.mxu0 0
    %562 = vmatmul.mubr.bf16.gmra.mrb[0].mxu0 %v527
    %v563 = vpop.f32.mrb[0].mxu0
    %v564 = vadd.f32 0.0, %v563
    %v565 = vpop.f32.mrb[0].mxu0
    %v566 = vpop.f32.mrb[0].mxu0
    %v567 = vpop.f32.mrb[0].mxu0
    %568 = vdwg.mxu0
    %v569 = vadd.f32 %v327, %v564
    %v570 = vxor.u32 %v569, 2147483648
    %v571 = vmul.f32 %v570, 1.442695
    %v572 = vpow.pop %v571
    %v573 = vadd.f32 %v572, 1.0
    %v574 = vrcp.pop %v573
    %v575 = vmul.f32 1.0, %v574
    %v576 = vtanh.pop %v569
    %v577 = vmul.f32 %v575, %v510
    %579 = vrot.lane.b32.xlu0 %v576, 64
    %v580 = vpop.permute.xlu0 %579
    %v582 = vmul.f32 %v575, %v580
    %584 = vrot.lane.b32.xlu0 %v582, 32
    %v585 = vpop.permute.xlu0 %584
    %v587 = vadd.f32 %v577, %v585
    %v588 = vtanh.pop %v587
    %590 = vrot.lane.b32.xlu0 %v588, 64
    %v591 = vpop.permute.xlu0 %590
    %v593 = vmul.f32 %v575, %v591
    %595 = vrot.lane.b32.xlu0 %v593, 32
    %v596 = vpop.permute.xlu0 %595
    %598 = vst.msk [vmem:[#allocation2 + $0x10] sm:$0xff] %vm53, %v596
    %v599 = vpack.c.bf16 %v593, %v593
    %601 = vrot.lane.b32.xlu0 %v599, 32
    %v602 = vpop.permute.xlu0 %601
    %v604 = vsel %vm53, %v602, 0
    %606 = vmatprep.subr.bf16.mxu0 0
    %607 = vmatpush1.bf16.msra.mxu0 %v364
    %608 = vmatprep.subr.bf16.mxu0 0
    %609 = vmatpush1.bf16.msra.mxu0 %v365
    %610 = vmatprep.subr.bf16.mxu0 0
    %611 = vmatpush1.bf16.msra.mxu0 0
    %612 = vmatprep.subr.bf16.mxu0 0
    %613 = vmatpush1.bf16.msra.mxu0 0
    %614 = vmatprep.subr.bf16.mxu0 0
    %615 = vmatpush1.bf16.msra.mxu0 0
    %616 = vmatprep.subr.bf16.mxu0 0
    %617 = vmatpush1.bf16.msra.mxu0 0
    %618 = vmatprep.subr.bf16.mxu0 0
    %619 = vmatpush1.bf16.msra.mxu0 0
    %620 = vmatprep.subr.bf16.mxu0 0
    %621 = vmatpush1.bf16.msra.mxu0 0
    %622 = vmatprep.subr.bf16.mxu0 0
    %623 = vmatpush1.bf16.msra.mxu0 0
    %624 = vmatprep.subr.bf16.mxu0 0
    %625 = vmatpush1.bf16.msra.mxu0 0
    %626 = vmatprep.subr.bf16.mxu0 0
    %627 = vmatpush1.bf16.msra.mxu0 0
    %628 = vmatprep.subr.bf16.mxu0 0
    %629 = vmatpush1.bf16.msra.mxu0 0
    %630 = vmatprep.subr.bf16.mxu0 0
    %631 = vmatpush1.bf16.msra.mxu0 0
    %632 = vmatprep.subr.bf16.mxu0 0
    %633 = vmatpush1.bf16.msra.mxu0 0
    %634 = vmatprep.subr.bf16.mxu0 0
    %635 = vmatpush1.bf16.msra.mxu0 0
    %636 = vmatprep.subr.bf16.mxu0 0
    %637 = vmatpush1.bf16.msra.mxu0 0
    %638 = vmatprep.mubr.bf16.mxu0 0
    %639 = vmatmul.mubr.bf16.gmra.mrb[0].mxu0 %v604
    %v640 = vpop.f32.mrb[0].mxu0
    %v641 = vadd.f32 0.0, %v640
    %v642 = vpop.f32.mrb[0].mxu0
    %v643 = vpop.f32.mrb[0].mxu0
    %v644 = vpop.f32.mrb[0].mxu0
    %645 = vdwg.mxu0
    %v646 = vadd.f32 %v330, %v641
    %v647 = vxor.u32 %v646, 2147483648
    %v648 = vmul.f32 %v647, 1.442695
    %v649 = vpow.pop %v648
    %v650 = vadd.f32 %v649, 1.0
    %v651 = vrcp.pop %v650
    %v652 = vmul.f32 1.0, %v651
    %v653 = vtanh.pop %v646
    %v654 = vmul.f32 %v652, %v587
    %656 = vrot.lane.b32.xlu0 %v653, 64
    %v657 = vpop.permute.xlu0 %656
    %v659 = vmul.f32 %v652, %v657
    %661 = vrot.lane.b32.xlu0 %v659, 32
    %v662 = vpop.permute.xlu0 %661
    %v664 = vadd.f32 %v654, %v662
    %v665 = vtanh.pop %v664
    %667 = vrot.lane.b32.xlu0 %v665, 64
    %v668 = vpop.permute.xlu0 %667
    %v670 = vmul.f32 %v652, %v668
    %672 = vrot.lane.b32.xlu0 %v670, 32
    %v673 = vpop.permute.xlu0 %672
    %675 = vst.msk [vmem:[#allocation2 + $0x18] sm:$0xff] %vm53, %v673
    %v676 = vpack.c.bf16 %v670, %v670
    %678 = vrot.lane.b32.xlu0 %v676, 32
    %v679 = vpop.permute.xlu0 %678
    %v681 = vsel %vm53, %v679, 0
    %683 = vmatprep.subr.bf16.mxu0 0
    %684 = vmatpush1.bf16.msra.mxu0 %v364
    %685 = vmatprep.subr.bf16.mxu0 0
    %686 = vmatpush1.bf16.msra.mxu0 %v365
    %687 = vmatprep.subr.bf16.mxu0 0
    %688 = vmatpush1.bf16.msra.mxu0 0
    %689 = vmatprep.subr.bf16.mxu0 0
    %690 = vmatpush1.bf16.msra.mxu0 0
    %691 = vmatprep.subr.bf16.mxu0 0
    %692 = vmatpush1.bf16.msra.mxu0 0
    %693 = vmatprep.subr.bf16.mxu0 0
    %694 = vmatpush1.bf16.msra.mxu0 0
    %695 = vmatprep.subr.bf16.mxu0 0
    %696 = vmatpush1.bf16.msra.mxu0 0
    %697 = vmatprep.subr.bf16.mxu0 0
    %698 = vmatpush1.bf16.msra.mxu0 0
    %699 = vmatprep.subr.bf16.mxu0 0
    %700 = vmatpush1.bf16.msra.mxu0 0
    %701 = vmatprep.subr.bf16.mxu0 0
    %702 = vmatpush1.bf16.msra.mxu0 0
    %703 = vmatprep.subr.bf16.mxu0 0
    %704 = vmatpush1.bf16.msra.mxu0 0
    %705 = vmatprep.subr.bf16.mxu0 0
    %706 = vmatpush1.bf16.msra.mxu0 0
    %707 = vmatprep.subr.bf16.mxu0 0
    %708 = vmatpush1.bf16.msra.mxu0 0
    %709 = vmatprep.subr.bf16.mxu0 0
    %710 = vmatpush1.bf16.msra.mxu0 0
    %711 = vmatprep.subr.bf16.mxu0 0
    %712 = vmatpush1.bf16.msra.mxu0 0
    %713 = vmatprep.subr.bf16.mxu0 0
    %714 = vmatpush1.bf16.msra.mxu0 0
    %715 = vmatprep.mubr.bf16.mxu0 0
    %716 = vmatmul.mubr.bf16.gmra.mrb[0].mxu0 %v681
    %v717 = vpop.f32.mrb[0].mxu0
    %v718 = vadd.f32 0.0, %v717
    %v719 = vpop.f32.mrb[0].mxu0
    %v720 = vpop.f32.mrb[0].mxu0
    %v721 = vpop.f32.mrb[0].mxu0
    %722 = vdwg.mxu0
    %v723 = vadd.f32 %v335, %v718
    %v724 = vxor.u32 %v723, 2147483648
    %v725 = vmul.f32 %v724, 1.442695
    %v726 = vpow.pop %v725
    %v727 = vadd.f32 %v726, 1.0
    %v728 = vrcp.pop %v727
    %v729 = vmul.f32 1.0, %v728
    %v730 = vtanh.pop %v723
    %v731 = vmul.f32 %v729, %v664
    %733 = vrot.lane.b32.xlu0 %v730, 64
    %v734 = vpop.permute.xlu0 %733
    %v736 = vmul.f32 %v729, %v734
    %738 = vrot.lane.b32.xlu0 %v736, 32
    %v739 = vpop.permute.xlu0 %738
    %v741 = vadd.f32 %v731, %v739
    %v742 = vtanh.pop %v741
    %744 = vrot.lane.b32.xlu0 %v742, 64
    %v745 = vpop.permute.xlu0 %744
    %v747 = vmul.f32 %v729, %v745
    %749 = vrot.lane.b32.xlu0 %v747, 32
    %v750 = vpop.permute.xlu0 %749
    %752 = vst.msk [vmem:[#allocation2 + $0x20] sm:$0xff] %vm53, %v750
    %v753 = vpack.c.bf16 %v747, %v747
    %755 = vrot.lane.b32.xlu0 %v753, 32
    %v756 = vpop.permute.xlu0 %755
    %v758 = vsel %vm53, %v756, 0
    %760 = vmatprep.subr.bf16.mxu0 0
    %761 = vmatpush1.bf16.msra.mxu0 %v364
    %762 = vmatprep.subr.bf16.mxu0 0
    %763 = vmatpush1.bf16.msra.mxu0 %v365
    %764 = vmatprep.subr.bf16.mxu0 0
    %765 = vmatpush1.bf16.msra.mxu0 0
    %766 = vmatprep.subr.bf16.mxu0 0
    %767 = vmatpush1.bf16.msra.mxu0 0
    %768 = vmatprep.subr.bf16.mxu0 0
    %769 = vmatpush1.bf16.msra.mxu0 0
    %770 = vmatprep.subr.bf16.mxu0 0
    %771 = vmatpush1.bf16.msra.mxu0 0
    %772 = vmatprep.subr.bf16.mxu0 0
    %773 = vmatpush1.bf16.msra.mxu0 0
    %774 = vmatprep.subr.bf16.mxu0 0
    %775 = vmatpush1.bf16.msra.mxu0 0
    %776 = vmatprep.subr.bf16.mxu0 0
    %777 = vmatpush1.bf16.msra.mxu0 0
    %778 = vmatprep.subr.bf16.mxu0 0
    %779 = vmatpush1.bf16.msra.mxu0 0
    %780 = vmatprep.subr.bf16.mxu0 0
    %781 = vmatpush1.bf16.msra.mxu0 0
    %782 = vmatprep.subr.bf16.mxu0 0
    %783 = vmatpush1.bf16.msra.mxu0 0
    %784 = vmatprep.subr.bf16.mxu0 0
    %785 = vmatpush1.bf16.msra.mxu0 0
    %786 = vmatprep.subr.bf16.mxu0 0
    %787 = vmatpush1.bf16.msra.mxu0 0
    %788 = vmatprep.subr.bf16.mxu0 0
    %789 = vmatpush1.bf16.msra.mxu0 0
    %790 = vmatprep.subr.bf16.mxu0 0
    %791 = vmatpush1.bf16.msra.mxu0 0
    %792 = vmatprep.mubr.bf16.mxu0 0
    %793 = vmatmul.mubr.bf16.gmra.mrb[0].mxu0 %v758
    %v794 = vpop.f32.mrb[0].mxu0
    %v795 = vadd.f32 0.0, %v794
    %v796 = vpop.f32.mrb[0].mxu0
    %v797 = vpop.f32.mrb[0].mxu0
    %v798 = vpop.f32.mrb[0].mxu0
    %799 = vdwg.mxu0
    %v800 = vadd.f32 %v338, %v795
    %v801 = vxor.u32 %v800, 2147483648
    %v802 = vmul.f32 %v801, 1.442695
    %v803 = vpow.pop %v802
    %v804 = vadd.f32 %v803, 1.0
    %v805 = vrcp.pop %v804
    %v806 = vmul.f32 1.0, %v805
    %v807 = vtanh.pop %v800
    %v808 = vmul.f32 %v806, %v741
    %810 = vrot.lane.b32.xlu0 %v807, 64
    %v811 = vpop.permute.xlu0 %810
    %v813 = vmul.f32 %v806, %v811
    %815 = vrot.lane.b32.xlu0 %v813, 32
    %v816 = vpop.permute.xlu0 %815
    %v818 = vadd.f32 %v808, %v816
    %v819 = vtanh.pop %v818
    %821 = vrot.lane.b32.xlu0 %v819, 64
    %v822 = vpop.permute.xlu0 %821
    %v824 = vmul.f32 %v806, %v822
    %826 = vrot.lane.b32.xlu0 %v824, 32
    %v827 = vpop.permute.xlu0 %826
    %829 = vst.msk [vmem:[#allocation2 + $0x28] sm:$0xff] %vm53, %v827
    %v830 = vpack.c.bf16 %v824, %v824
    %832 = vrot.lane.b32.xlu0 %v830, 32
    %v833 = vpop.permute.xlu0 %832
    %v835 = vsel %vm53, %v833, 0
    %837 = vmatprep.subr.bf16.mxu0 0
    %838 = vmatpush1.bf16.msra.mxu0 %v364
    %839 = vmatprep.subr.bf16.mxu0 0
    %840 = vmatpush1.bf16.msra.mxu0 %v365
    %841 = vmatprep.subr.bf16.mxu0 0
    %842 = vmatpush1.bf16.msra.mxu0 0
    %843 = vmatprep.subr.bf16.mxu0 0
    %844 = vmatpush1.bf16.msra.mxu0 0
    %845 = vmatprep.subr.bf16.mxu0 0
    %846 = vmatpush1.bf16.msra.mxu0 0
    %847 = vmatprep.subr.bf16.mxu0 0
    %848 = vmatpush1.bf16.msra.mxu0 0
    %849 = vmatprep.subr.bf16.mxu0 0
    %850 = vmatpush1.bf16.msra.mxu0 0
    %851 = vmatprep.subr.bf16.mxu0 0
    %852 = vmatpush1.bf16.msra.mxu0 0
    %853 = vmatprep.subr.bf16.mxu0 0
    %854 = vmatpush1.bf16.msra.mxu0 0
    %855 = vmatprep.subr.bf16.mxu0 0
    %856 = vmatpush1.bf16.msra.mxu0 0
    %857 = vmatprep.subr.bf16.mxu0 0
    %858 = vmatpush1.bf16.msra.mxu0 0
    %859 = vmatprep.subr.bf16.mxu0 0
    %860 = vmatpush1.bf16.msra.mxu0 0
    %861 = vmatprep.subr.bf16.mxu0 0
    %862 = vmatpush1.bf16.msra.mxu0 0
    %863 = vmatprep.subr.bf16.mxu0 0
    %864 = vmatpush1.bf16.msra.mxu0 0
    %865 = vmatprep.subr.bf16.mxu0 0
    %866 = vmatpush1.bf16.msra.mxu0 0
    %867 = vmatprep.subr.bf16.mxu0 0
    %868 = vmatpush1.bf16.msra.mxu0 0
    %869 = vmatprep.mubr.bf16.mxu0 0
    %870 = vmatmul.mubr.bf16.gmra.mrb[0].mxu0 %v835
    %v871 = vpop.f32.mrb[0].mxu0
    %v872 = vadd.f32 0.0, %v871
    %v873 = vpop.f32.mrb[0].mxu0
    %v874 = vpop.f32.mrb[0].mxu0
    %v875 = vpop.f32.mrb[0].mxu0
    %876 = vdwg.mxu0
    %v877 = vadd.f32 %v343, %v872
    %v878 = vxor.u32 %v877, 2147483648
    %v879 = vmul.f32 %v878, 1.442695
    %v880 = vpow.pop %v879
    %v881 = vadd.f32 %v880, 1.0
    %v882 = vrcp.pop %v881
    %v883 = vmul.f32 1.0, %v882
    %v884 = vtanh.pop %v877
    %v885 = vmul.f32 %v883, %v818
    %887 = vrot.lane.b32.xlu0 %v884, 64
    %v888 = vpop.permute.xlu0 %887
    %v890 = vmul.f32 %v883, %v888
    %892 = vrot.lane.b32.xlu0 %v890, 32
    %v893 = vpop.permute.xlu0 %892
    %v895 = vadd.f32 %v885, %v893
    %v896 = vtanh.pop %v895
    %898 = vrot.lane.b32.xlu0 %v896, 64
    %v899 = vpop.permute.xlu0 %898
    %v901 = vmul.f32 %v883, %v899
    %903 = vrot.lane.b32.xlu0 %v901, 32
    %v904 = vpop.permute.xlu0 %903
    %906 = vst.msk [vmem:[#allocation2 + $0x30] sm:$0xff] %vm53, %v904
    %v907 = vpack.c.bf16 %v901, %v901
    %909 = vrot.lane.b32.xlu0 %v907, 32
    %v910 = vpop.permute.xlu0 %909
    %v912 = vsel %vm53, %v910, 0
    %914 = vmatprep.subr.bf16.mxu0 0
    %915 = vmatpush1.bf16.msra.mxu0 %v364
    %916 = vmatprep.subr.bf16.mxu0 0
    %917 = vmatpush1.bf16.msra.mxu0 %v365
    %918 = vmatprep.subr.bf16.mxu0 0
    %919 = vmatpush1.bf16.msra.mxu0 0
    %920 = vmatprep.subr.bf16.mxu0 0
    %921 = vmatpush1.bf16.msra.mxu0 0
    %922 = vmatprep.subr.bf16.mxu0 0
    %923 = vmatpush1.bf16.msra.mxu0 0
    %924 = vmatprep.subr.bf16.mxu0 0
    %925 = vmatpush1.bf16.msra.mxu0 0
    %926 = vmatprep.subr.bf16.mxu0 0
    %927 = vmatpush1.bf16.msra.mxu0 0
    %928 = vmatprep.subr.bf16.mxu0 0
    %929 = vmatpush1.bf16.msra.mxu0 0
    %930 = vmatprep.subr.bf16.mxu0 0
    %931 = vmatpush1.bf16.msra.mxu0 0
    %932 = vmatprep.subr.bf16.mxu0 0
    %933 = vmatpush1.bf16.msra.mxu0 0
    %934 = vmatprep.subr.bf16.mxu0 0
    %935 = vmatpush1.bf16.msra.mxu0 0
    %936 = vmatprep.subr.bf16.mxu0 0
    %937 = vmatpush1.bf16.msra.mxu0 0
    %938 = vmatprep.subr.bf16.mxu0 0
    %939 = vmatpush1.bf16.msra.mxu0 0
    %940 = vmatprep.subr.bf16.mxu0 0
    %941 = vmatpush1.bf16.msra.mxu0 0
    %942 = vmatprep.subr.bf16.mxu0 0
    %943 = vmatpush1.bf16.msra.mxu0 0
    %944 = vmatprep.subr.bf16.mxu0 0
    %945 = vmatpush1.bf16.msra.mxu0 0
    %946 = vmatprep.mubr.bf16.mxu0 0
    %947 = vmatmul.mubr.bf16.gmra.mrb[0].mxu0 %v912
    %v948 = vpop.f32.mrb[0].mxu0
    %v949 = vadd.f32 0.0, %v948
    %v950 = vpop.f32.mrb[0].mxu0
    %v951 = vpop.f32.mrb[0].mxu0
    %v952 = vpop.f32.mrb[0].mxu0
    %953 = vdwg.mxu0
    %v954 = vadd.f32 %v346, %v949
    %v955 = vxor.u32 %v954, 2147483648
    %v956 = vmul.f32 %v955, 1.442695
    %v957 = vpow.pop %v956
    %v958 = vadd.f32 %v957, 1.0
    %v959 = vrcp.pop %v958
    %v960 = vmul.f32 1.0, %v959
    %v961 = vtanh.pop %v954
    %v962 = vmul.f32 %v960, %v895
    %964 = vrot.lane.b32.xlu0 %v961, 64
    %v965 = vpop.permute.xlu0 %964
    %v967 = vmul.f32 %v960, %v965
    %969 = vrot.lane.b32.xlu0 %v967, 32
    %v970 = vpop.permute.xlu0 %969
    %v972 = vadd.f32 %v962, %v970
    %v973 = vtanh.pop %v972
    %975 = vrot.lane.b32.xlu0 %v973, 64
    %v976 = vpop.permute.xlu0 %975
    %v978 = vmul.f32 %v960, %v976
    %980 = vrot.lane.b32.xlu0 %v978, 32
    %v981 = vpop.permute.xlu0 %980
    %983 = vst.msk [vmem:[#allocation2 + $0x38] sm:$0xff] %vm53, %v981
    %984 = vst.msk [vmem:[#allocation3] sm:$0xff] %vm53, %v981
    %986 = vrot.lane.b32.xlu0 %v972, 96
    %v987 = vpop.permute.xlu0 %986
    %989 = vst.msk [vmem:[#allocation4] sm:$0xff] %vm53, %v987
    %990 = vst.msk [vmem:[#allocation7] sm:$0xff] %vm53, %v981
    %991 = vst.msk [vmem:[#allocation9] sm:$0xff] %vm53, %v987
    %v992 = vld [vmem:[#allocation2] sm:$0xff]
    %v993 = vld [vmem:[#allocation2 + $0x8] sm:$0xff]
    %v994 = vld [vmem:[#allocation2 + $0x10] sm:$0xff]
    %v995 = vld [vmem:[#allocation2 + $0x18] sm:$0xff]
    %v996 = vld [vmem:[#allocation2 + $0x20] sm:$0xff]
    %v997 = vld [vmem:[#allocation2 + $0x28] sm:$0xff]
    %v998 = vld [vmem:[#allocation2 + $0x30] sm:$0xff]
    %v999 = vld [vmem:[#allocation2 + $0x38] sm:$0xff]
    %v1000 = vpack.c.bf16 %v993, %v992
    %v1001 = vpack.c.bf16 %v995, %v994
    %v1002 = vpack.c.bf16 %v997, %v996
    %v1003 = vpack.c.bf16 %v999, %v998
    %v1004 = vld [vmem:[%s7] sm:$0xf]
    %v1005 = vld [vmem:[%s7 + $0x4] sm:$0xf]
    %v1006 = vld [vmem:[%s7 + $0x8] sm:$0xf]
    %v1007 = vld [vmem:[%s7 + $0xc] sm:$0xf]
    %v1008 = vld [vmem:[%s8] sm:$0x1]
    %v1010 = vlaneseq
    %v1011 = vshrl.u32 %v1010, 7
    %v1012 = vsub.s32 0, %v1011
    %v1013 = vrot.slane %v1008, %v1012
    %v1019 = vunpack.c.l.b16 %v1004
    %v1020 = vunpack.c.l.b16 %v1005
    %v1021 = vunpack.c.l.b16 %v1006
    %v1022 = vunpack.c.l.b16 %v1007
    %v1023 = vpack.c.b16 %v1020, %v1019
    %v1024 = vpack.c.b16 %v1022, %v1021
    %v1028 = vsel %vm53, %v1000, 0
    %v1031 = vsel %vm53, %v1001, 0
    %v1034 = vsel %vm53, %v1002, 0
    %v1037 = vsel %vm53, %v1003, 0
    %1039 = vmatprep.subr.bf16.mxu0 0
    %1040 = vmatpush1.bf16.msra.mxu0 %v1023
    %1041 = vmatprep.subr.bf16.mxu0 0
    %1042 = vmatpush1.bf16.msra.mxu0 %v1024
    %1043 = vmatprep.subr.bf16.mxu0 0
    %1044 = vmatpush1.bf16.msra.mxu0 0
    %1045 = vmatprep.subr.bf16.mxu0 0
    %1046 = vmatpush1.bf16.msra.mxu0 0
    %1047 = vmatprep.subr.bf16.mxu0 0
    %1048 = vmatpush1.bf16.msra.mxu0 0
    %1049 = vmatprep.subr.bf16.mxu0 0
    %1050 = vmatpush1.bf16.msra.mxu0 0
    %1051 = vmatprep.subr.bf16.mxu0 0
    %1052 = vmatpush1.bf16.msra.mxu0 0
    %1053 = vmatprep.subr.bf16.mxu0 0
    %1054 = vmatpush1.bf16.msra.mxu0 0
    %1055 = vmatprep.subr.bf16.mxu0 0
    %1056 = vmatpush1.bf16.msra.mxu0 0
    %1057 = vmatprep.subr.bf16.mxu0 0
    %1058 = vmatpush1.bf16.msra.mxu0 0
    %1059 = vmatprep.subr.bf16.mxu0 0
    %1060 = vmatpush1.bf16.msra.mxu0 0
    %1061 = vmatprep.subr.bf16.mxu0 0
    %1062 = vmatpush1.bf16.msra.mxu0 0
    %1063 = vmatprep.subr.bf16.mxu0 0
    %1064 = vmatpush1.bf16.msra.mxu0 0
    %1065 = vmatprep.subr.bf16.mxu0 0
    %1066 = vmatpush1.bf16.msra.mxu0 0
    %1067 = vmatprep.subr.bf16.mxu0 0
    %1068 = vmatpush1.bf16.msra.mxu0 0
    %1069 = vmatprep.subr.bf16.mxu0 0
    %1070 = vmatpush1.bf16.msra.mxu0 0
    %1071 = vmatprep.mubr.bf16.mxu0 0
    %1072 = vmatmul.mubr.bf16.gmra.mrb[0].mxu0 %v1028
    %v1073 = vpop.f32.mrb[0].mxu0
    %v1074 = vadd.f32 %v1013, %v1073
    %v1075 = vpop.f32.mrb[0].mxu0
    %v1076 = vpop.f32.mrb[0].mxu0
    %v1077 = vadd.f32 %v1013, %v1076
    %v1078 = vpop.f32.mrb[0].mxu0
    %1079 = vmatprep.mubr.bf16.mxu0 0
    %1080 = vmatmul.mubr.bf16.gmra.mrb[0].mxu0 %v1031
    %v1081 = vpop.f32.mrb[0].mxu0
    %v1082 = vadd.f32 %v1013, %v1081
    %v1083 = vpop.f32.mrb[0].mxu0
    %v1084 = vpop.f32.mrb[0].mxu0
    %v1085 = vadd.f32 %v1013, %v1084
    %v1086 = vpop.f32.mrb[0].mxu0
    %1087 = vmatprep.mubr.bf16.mxu0 0
    %1088 = vmatmul.mubr.bf16.gmra.mrb[0].mxu0 %v1034
    %v1089 = vpop.f32.mrb[0].mxu0
    %v1090 = vadd.f32 %v1013, %v1089
    %v1091 = vpop.f32.mrb[0].mxu0
    %v1092 = vpop.f32.mrb[0].mxu0
    %v1093 = vadd.f32 %v1013, %v1092
    %v1094 = vpop.f32.mrb[0].mxu0
    %1095 = vmatprep.mubr.bf16.mxu0 0
    %1096 = vmatmul.mubr.bf16.gmra.mrb[0].mxu0 %v1037
    %v1097 = vpop.f32.mrb[0].mxu0
    %v1098 = vadd.f32 %v1013, %v1097
    %v1099 = vpop.f32.mrb[0].mxu0
    %v1100 = vpop.f32.mrb[0].mxu0
    %v1101 = vadd.f32 %v1013, %v1100
    %v1102 = vpop.f32.mrb[0].mxu0
    %1103 = vdwg.mxu0
    %1104 = vst [vmem:[#allocation5] sm:$0xff] %v1074
    %1105 = vst [vmem:[#allocation5 + $0x8] sm:$0xff] %v1077
    %1106 = vst [vmem:[#allocation5 + $0x10] sm:$0xff] %v1082
    %1107 = vst [vmem:[#allocation5 + $0x18] sm:$0xff] %v1085
    %1108 = vst [vmem:[#allocation5 + $0x20] sm:$0xff] %v1090
    %1109 = vst [vmem:[#allocation5 + $0x28] sm:$0xff] %v1093
    %1110 = vst [vmem:[#allocation5 + $0x30] sm:$0xff] %v1098
    %1111 = vst [vmem:[#allocation5 + $0x38] sm:$0xff] %v1101
    // Predicated region
    $region42: #{tpu_custom_call.1} parent=1 // pred_check
      _
    $region43: #{tpu_custom_call.1} parent=1 // pred_check_branch
      %1113 = sbr.rel (0) target = $region45
    $region44: #{tpu_custom_call.1} parent=1 // pred_region
      %s1115 = ssub.s32 1024, 1024
      %1116 = vsyncadd [#allocation6], %s1115
      %s1117 = sshll.u32 [#allocation5], 4
      %s1118 = int_to_ptr.vmem [resolvable:$true] %s1117
      %1123 = dma.vmem_to_hbm [thread:$0]  %s1118, 1024, %s9, [#allocation6], 128, 128, 8
    $region45: #{tpu_custom_call.1} parent=1 // pred_fallthru
      _
    // Predicated region
    $region46: #{tpu_custom_call.1} parent=1 // pred_check
      _
    $region47: #{tpu_custom_call.1} parent=1 // pred_check_branch
      %1125 = sbr.rel (0) target = $region49
    $region48: #{tpu_custom_call.1} parent=1 // pred_region
      %s1127 = ssub.s32 128, 128
      %1128 = vsyncadd [#allocation8], %s1127
      %s1130 = sshll.u32 [#allocation7], 4
      %s1131 = int_to_ptr.vmem [resolvable:$true] %s1130
      %1133 = dma.vmem_to_hbm [thread:$0]  %s1131, 128, %s10, [#allocation8]
    $region49: #{tpu_custom_call.1} parent=1 // pred_fallthru
      _
    // Predicated region
    $region50: #{tpu_custom_call.1} parent=1 // pred_check
      _
    $region51: #{tpu_custom_call.1} parent=1 // pred_check_branch
      %1135 = sbr.rel (0) target = $region53
    $region52: #{tpu_custom_call.1} parent=1 // pred_region
      %s1137 = ssub.s32 128, 128
      %1138 = vsyncadd [#allocation8], %s1137
      %s1140 = sshll.u32 [#allocation9], 4
      %s1141 = int_to_ptr.vmem [resolvable:$true] %s1140
      %1143 = dma.vmem_to_hbm [thread:$0]  %s1141, 128, %s11, [#allocation8]
    $region53: #{tpu_custom_call.1} parent=1 // pred_fallthru
      _
    // Predicated region
    $region54: #{tpu_custom_call.1} parent=1 // pred_check
      _
    $region55: #{tpu_custom_call.1} parent=1 // pred_check_branch
      %1145 = sbr.rel (0) target = $region57
    $region56: #{tpu_custom_call.1} parent=1 // pred_region
      %1146 = dma.done [#allocation6], 1024
    $region57: #{tpu_custom_call.1} parent=1 // pred_fallthru
      _
    // Predicated region
    $region58: #{tpu_custom_call.1} parent=1 // pred_check
      _
    $region59: #{tpu_custom_call.1} parent=1 // pred_check_branch
      %1148 = sbr.rel (0) target = $region61
    $region60: #{tpu_custom_call.1} parent=1 // pred_region
      %1149 = dma.done [#allocation8], 128
    $region61: #{tpu_custom_call.1} parent=1 // pred_fallthru
      _
    // Predicated region
    $region62: #{tpu_custom_call.1} parent=1 // pred_check
      _
    $region63: #{tpu_custom_call.1} parent=1 // pred_check_branch
      %1151 = sbr.rel (0) target = $region65
    $region64: #{tpu_custom_call.1} parent=1 // pred_region
      %1152 = dma.done [#allocation8], 128
    $region65: #{tpu_custom_call.1} parent=1 // pred_fallthru
      _
    %1153 = vsyncpa [#allocation6], 1
    %1154 = vsyncpa [#allocation8], 1

</llo_original>
